<compile_context>
chip_gen: v6e
topology: v6e:2x2x1
jax: 0.10.0
libtpu: 0.0.40
codegen_flags: <defaults>
</compile_context>

<pallas_src>
import math
import jax
import jax.numpy as jnp
from jax.experimental import pallas as pl
from jax.experimental.pallas import tpu as pltpu

# ---------------- model config (matches TransformerConfig) ------------------
TOKENS_PER_BLOCK = 4
MAX_BLOCKS = 2
T = TOKENS_PER_BLOCK * MAX_BLOCKS      # max_tokens = seq len = 8
D = 32                                 # emb_dim
H = 4                                  # n_heads
HD = D // H                            # head_dim = 8
N_LAYERS = 2                           # n_layers
LN_EPS = 1e-5
NEG_INF = -1e30                        # Python float (a jnp scalar would be captured)
QKV_PAD = 128                          # qkv matmul output padded to one full lane row

# ---------------- tiling knobs -----------------------------------------------
ATTN_GROUP = 16      # sequences folded into one (GR, H*GR) fused-head attention
BATCH_BLOCK = 128    # sequences per grid step  (rows per block = BATCH_BLOCK * T)


def _layer_norm(v, w, b):
    mu = jnp.mean(v, axis=-1, keepdims=True)
    var = jnp.mean((v - mu) ** 2, axis=-1, keepdims=True)
    return (v - mu) * jax.lax.rsqrt(var + LN_EPS) * w + b


def _gelu(x, approx):
    if approx:
        # tanh approximation -> EUP path (slightly deviates from nn.GELU())
        return jax.nn.gelu(x, approximate=True)
    # exact-erf GELU; erf via Abramowitz-Stegun 7.1.26 (|err| < 1.5e-7).
    # Mosaic has no erf primitive, so build it from abs/exp/where/div.
    z = x * 0.7071067811865476
    az = jnp.abs(z)
    t = 1.0 / (1.0 + 0.3275911 * az)
    poly = t * (0.254829592 + t * (-0.284496736 + t * (1.421413741
               + t * (-1.453152027 + t * 1.061405429))))
    erf_abs = 1.0 - poly * jnp.exp(-az * az)
    erf = jnp.where(z < 0.0, -erf_abs, erf_abs)
    return 0.5 * x * (1.0 + erf)


# =============================================================================
# Kernel
# =============================================================================
def _make_kernel(n_layers, bb, g, compute_dtype, gelu_approx):
    R = bb * T            # rows per block
    GR = g * T            # rows per attention group
    n_groups = bb // g
    cd = compute_dtype

    def kernel(x_ref, bias_ref, smask_ref,
               wqkv_ref, bqkv_ref, wp_ref, bpj_ref,
               ln1w_ref, ln1b_ref, ln2w_ref, ln2b_ref,
               w1_ref, b1_ref, w2_ref, b2_ref,
               lnfw_ref, lnfb_ref,
               o_ref):
        x = x_ref[...]                  # (R, D) f32 residual stream
        attn_bias = bias_ref[...]       # (GR, GR) additive mask: 0 valid / -1e30 masked
        smask = smask_ref[...]          # (H*GR, D) 0/1 head row-stack mask

        for l in range(n_layers):
            # ---------- attention branch (pre-LN, heads fused) ----------
            h1 = _layer_norm(x, ln1w_ref[l], ln1b_ref[l])
            # fused QKV projection (padded to 128 lanes); softmax scale folded into Q
            qkv = jnp.dot(h1.astype(cd), wqkv_ref[l],
                          preferred_element_type=jnp.float32) + bqkv_ref[l]    # (R, 128)
            q = qkv[:, 0 * D:1 * D]     # (R, D)
            k = qkv[:, 1 * D:2 * D]
            v = qkv[:, 2 * D:3 * D]

            y_rows = []
            for gi in range(n_groups):                       # static loop
                rows = slice(gi * GR, (gi + 1) * GR)
                qg = q[rows].astype(cd)                                           # (GR, D)
                kst = (jnp.concatenate([k[rows]] * H, axis=0) * smask).astype(cd)  # (H*GR, D)
                vst = (jnp.concatenate([v[rows]] * H, axis=0) * smask).astype(cd)  # (H*GR, D)
                # scores for ALL heads in ONE matmul: (GR, D) . (H*GR, D)^T
                s_cat = jax.lax.dot_general(
                    qg, kst, (((1,), (1,)), ((), ())),
                    preferred_element_type=jnp.float32)                          # (GR, H*GR)
                # per-head softmax on 128-lane column blocks
                p_blocks = []
                for h in range(H):                           # static loop
                    s_h = s_cat[:, h * GR:(h + 1) * GR] + attn_bias
                    s_h = s_h - jnp.max(s_h, axis=-1, keepdims=True)
                    e_h = jnp.exp(s_h)
                    p_blocks.append(e_h * pl.reciprocal(
                        jnp.sum(e_h, axis=-1, keepdims=True), approx=True))
                p_cat = jnp.concatenate(p_blocks, axis=1).astype(cd)             # (GR, H*GR)
                # AV for ALL heads in ONE matmul (head-masked V row-stack)
                y_rows.append(jnp.dot(p_cat, vst,
                                      preferred_element_type=jnp.float32))       # (GR, D)
            y = y_rows[0] if n_groups == 1 else jnp.concatenate(y_rows, axis=0)  # (R, D)

            x = x + jnp.dot(y.astype(cd), wp_ref[l],
                            preferred_element_type=jnp.float32) + bpj_ref[l]

            # -------------------- MLP branch (pre-LN) --------------------
            h2 = _layer_norm(x, ln2w_ref[l], ln2b_ref[l])
            m = jnp.dot(h2.astype(cd), w1_ref[l],
                        preferred_element_type=jnp.float32) + b1_ref[l]
            m = _gelu(m, gelu_approx)
            m = jnp.dot(m.astype(cd), w2_ref[l],
                        preferred_element_type=jnp.float32) + b2_ref[l]
            x = x + m

        # -------------------- final LayerNorm --------------------
        o_ref[...] = _layer_norm(x, lnfw_ref[...], lnfb_ref[...])

    return kernel


# =============================================================================
# Wrapper
# =============================================================================
def _choose_tiling(B):
    g = min(ATTN_GROUP, B)                 # attention group size
    b_pad = -(-B // g) * g                 # pad batch to a multiple of g
    bb = min(BATCH_BLOCK, b_pad)
    bb = max(g, (bb // g) * g)             # sequences per grid step (multiple of g)
    b_pad = -(-b_pad // bb) * bb
    # v7x megacore: prefer an even number of grid steps when bb can be split cleanly
    if (b_pad // bb) % 2 == 1 and bb % (2 * g) == 0:
        bb //= 2
        b_pad = -(-b_pad // bb) * bb
    return g, bb, b_pad


def transformer_forward(x, params, compute_dtype=jnp.bfloat16, gelu_approx=False):
    """x: (B, T, D) float32. params: dict from init_params (PyTorch (out,in) layout).

    compute_dtype: dtype of MXU matmul *operands* (default bf16; accumulation, LN,
    softmax, GELU and the residual stream stay float32 on every chip generation).
    """
    B = x.shape[0]
    L = len(params["layers"])
    g, bb, b_pad = _choose_tiling(B)
    R = bb * T
    GR = g * T
    cd = compute_dtype

    # ---- pack parameters: (out,in) -> (in,out), fuse+pad QKV, fold softmax scale ----
    scale = 1.0 / math.sqrt(HD)
    pad_cols = QKV_PAD - 3 * D
    st = lambda f: jnp.stack([f(p) for p in params["layers"]])
    wqkv = st(lambda p: jnp.pad(
        jnp.concatenate([p["Wq"].T * scale, p["Wk"].T, p["Wv"].T], axis=1),
        ((0, 0), (0, pad_cols)))).astype(cd)                                  # (L, D, 128)
    bqkv = st(lambda p: jnp.pad(
        jnp.concatenate([p["bq"] * scale, p["bk"], p["bv"]]),
        (0, pad_cols))[None, :])                                              # (L, 1, 128) f32
    wp = st(lambda p: p["Wproj"].T).astype(cd)                                # (L, D, D)
    bpj = st(lambda p: p["bproj"][None, :])                                   # (L, 1, D)
    ln1w = st(lambda p: p["ln1_w"][None, :]); ln1b = st(lambda p: p["ln1_b"][None, :])
    ln2w = st(lambda p: p["ln2_w"][None, :]); ln2b = st(lambda p: p["ln2_b"][None, :])
    w1 = st(lambda p: p["W1"].T).astype(cd)                                   # (L, D, 4D)
    b1 = st(lambda p: p["b1"][None, :])                                       # (L, 1, 4D)
    w2 = st(lambda p: p["W2"].T).astype(cd)                                   # (L, 4D, D)
    b2 = st(lambda p: p["b2"][None, :])                                       # (L, 1, D)
    lnfw = params["lnf_w"][None, :]                                           # (1, D)
    lnfb = params["lnf_b"][None, :]                                           # (1, D)
    packed = [wqkv, bqkv, wp, bpj, ln1w, ln1b, ln2w, ln2b, w1, b1, w2, b2, lnfw, lnfb]

    # ---- masks precomputed on the host side (no in-kernel iota / integer div) ----
    idx = jnp.arange(GR)
    seq = idx // T
    valid = (idx[:, None] >= idx[None, :]) & (seq[:, None] == seq[None, :])
    attn_bias = jnp.where(valid, 0.0, NEG_INF).astype(jnp.float32)            # (GR, GR)
    head_row = jnp.arange(H * GR) // GR
    head_col = jnp.arange(D) // HD
    stack_mask = (head_row[:, None] == head_col[None, :]).astype(jnp.float32)  # (H*GR, D)

    # ---- pad batch and flatten to rows: (b_pad*T, D) ----
    xf = x.astype(jnp.float32)
    if b_pad != B:
        xf = jnp.pad(xf, ((0, b_pad - B), (0, 0), (0, 0)))
    rows = xf.reshape(b_pad * T, D)

    def full_spec(p):
        nd = p.ndim
        return pl.BlockSpec(p.shape, lambda i, _nd=nd: (0,) * _nd)

    kernel = _make_kernel(L, bb, g, cd, gelu_approx)
    out = pl.pallas_call(
        kernel,
        out_shape=jax.ShapeDtypeStruct((b_pad * T, D), jnp.float32),
        grid_spec=pltpu.PrefetchScalarGridSpec(
            num_scalar_prefetch=0,
            grid=(b_pad // bb,),
            in_specs=[pl.BlockSpec((R, D), lambda i: (i, 0)),
                      full_spec(attn_bias), full_spec(stack_mask)]
                     + [full_spec(p) for p in packed],
            out_specs=pl.BlockSpec((R, D), lambda i: (i, 0)),
        ),
        compiler_params=pltpu.CompilerParams(
            dimension_semantics=("parallel",),
            vmem_limit_bytes=32 * 1024 * 1024,
        ),
    )(rows, attn_bias, stack_mask, *packed)

    return out[:B * T].reshape(B, T, D)


# =============================================================================
# Pure-JAX reference (mirrors the PyTorch module, f32, exact softmax/GELU)
# =============================================================================
def reference_transformer(x, params):
    def ln(v, w, b):
        mu = v.mean(-1, keepdims=True)
        var = ((v - mu) ** 2).mean(-1, keepdims=True)
        return (v - mu) * jax.lax.rsqrt(var + LN_EPS) * w + b

    B, t, _ = x.shape
    mask = jnp.tril(jnp.ones((t, t)))
    for p in params["layers"]:
        h1 = ln(x, p["ln1_w"], p["ln1_b"])
        q = h1 @ p["Wq"].T + p["bq"]
        k = h1 @ p["Wk"].T + p["bk"]
        v = h1 @ p["Wv"].T + p["bv"]
        qh = q.reshape(B, t, H, HD).transpose(0, 2, 1, 3)
        kh = k.reshape(B, t, H, HD).transpose(0, 2, 1, 3)
        vh = v.reshape(B, t, H, HD).transpose(0, 2, 1, 3)
        s = jnp.einsum("bhid,bhjd->bhij", qh, kh) / math.sqrt(HD)
        s = jnp.where(mask == 0, -jnp.inf, s)
        a = jax.nn.softmax(s, axis=-1)
        y = (a @ vh).transpose(0, 2, 1, 3).reshape(B, t, D)
        x = x + y @ p["Wproj"].T + p["bproj"]
        h2 = ln(x, p["ln2_w"], p["ln2_b"])
        m = jax.nn.gelu(h2 @ p["W1"].T + p["b1"], approximate=False) @ p["W2"].T + p["b2"]
        x = x + m
    return ln(x, params["lnf_w"], params["lnf_b"])


def init_params(key, n_layers):
    keys = iter(jax.random.split(key, n_layers * 16 + 2))

    def nrm(shape, s):
        return s * jax.random.normal(next(keys), shape, jnp.float32)

    layers = []
    for _ in range(n_layers):
        layers.append({
            "ln1_w": 1.0 + nrm((D,), 0.05), "ln1_b": nrm((D,), 0.05),
            "Wq": nrm((D, D), 0.02), "bq": nrm((D,), 0.01),
            "Wk": nrm((D, D), 0.02), "bk": nrm((D,), 0.01),
            "Wv": nrm((D, D), 0.02), "bv": nrm((D,), 0.01),
            "Wproj": nrm((D, D), 0.02), "bproj": nrm((D,), 0.01),
            "ln2_w": 1.0 + nrm((D,), 0.05), "ln2_b": nrm((D,), 0.05),
            "W1": nrm((4 * D, D), 0.02), "b1": nrm((4 * D,), 0.01),
            "W2": nrm((D, 4 * D), 0.02), "b2": nrm((D,), 0.01),
        })
    return {"layers": layers,
            "lnf_w": 1.0 + nrm((D,), 0.05),
            "lnf_b": nrm((D,), 0.05)}


if __name__ == "__main__":
    key = jax.random.PRNGKey(0)
    kx, kp = jax.random.split(key)
    B = 2
    x = jax.random.normal(kx, (B, T, D), jnp.float32)
    params = init_params(kp, N_LAYERS)

    with jax.default_matmul_precision("highest"):
        ref = jax.block_until_ready(reference_transformer(x, params))

    # default path: bf16 MXU operands, f32 accumulation / LN / softmax / GELU
    out_bf16 = jax.block_until_ready(transformer_forward(x, params))
    assert out_bf16.shape == (B, T, D)
    err_bf = float(jnp.max(jnp.abs(out_bf16 - ref)))
    assert err_bf < 2e-2, f"bf16 max abs err {err_bf}"

    # f32 fallback path (tighter check; approx reciprocal + poly-erf only)
    out_f32 = jax.block_until_ready(
        transformer_forward(x, params, compute_dtype=jnp.float32))
    err_f32 = float(jnp.max(jnp.abs(out_f32 - ref)))
    assert err_f32 < 3e-3, f"f32 max abs err {err_f32}"

    print("KERNEL_OK")
</pallas_src>

<mosaic_0001>
module attributes {stable_mosaic.version = 11 : i64} {
  func.func @kernel(%arg0: i32, %arg1: memref<16x32xf32, #tpu.memory_space<vmem>>, %arg2: memref<16x16xf32, #tpu.memory_space<vmem>>, %arg3: memref<64x32xf32, #tpu.memory_space<vmem>>, %arg4: memref<2x32x128xbf16, #tpu.memory_space<vmem>>, %arg5: memref<2x1x128xf32, #tpu.memory_space<vmem>>, %arg6: memref<2x32x32xbf16, #tpu.memory_space<vmem>>, %arg7: memref<2x1x32xf32, #tpu.memory_space<vmem>>, %arg8: memref<2x1x32xf32, #tpu.memory_space<vmem>>, %arg9: memref<2x1x32xf32, #tpu.memory_space<vmem>>, %arg10: memref<2x1x32xf32, #tpu.memory_space<vmem>>, %arg11: memref<2x1x32xf32, #tpu.memory_space<vmem>>, %arg12: memref<2x32x128xbf16, #tpu.memory_space<vmem>>, %arg13: memref<2x1x128xf32, #tpu.memory_space<vmem>>, %arg14: memref<2x128x32xbf16, #tpu.memory_space<vmem>>, %arg15: memref<2x1x32xf32, #tpu.memory_space<vmem>>, %arg16: memref<1x32xf32, #tpu.memory_space<vmem>>, %arg17: memref<1x32xf32, #tpu.memory_space<vmem>>, %arg18: memref<16x32xf32, #tpu.memory_space<vmem>>) attributes {dimension_semantics = [#tpu.dimension_semantics<parallel>], iteration_bounds = array<i64: 1>, scalar_prefetch = 0 : i64, scratch_operands = 0 : i64, tpu.core_type = #tpu.core_type<tc>, window_params = [{transform_indices = @transform_0, window_bounds = array<i64: 16, 32>}, {pipeline_mode = #tpu.pipeline_mode<synchronous>, transform_indices = @transform_1, window_bounds = array<i64: 16, 16>}, {pipeline_mode = #tpu.pipeline_mode<synchronous>, transform_indices = @transform_2, window_bounds = array<i64: 64, 32>}, {pipeline_mode = #tpu.pipeline_mode<synchronous>, transform_indices = @transform_3, window_bounds = array<i64: 2, 32, 128>}, {pipeline_mode = #tpu.pipeline_mode<synchronous>, transform_indices = @transform_4, window_bounds = array<i64: 2, 1, 128>}, {pipeline_mode = #tpu.pipeline_mode<synchronous>, transform_indices = @transform_5, window_bounds = array<i64: 2, 32, 32>}, {pipeline_mode = #tpu.pipeline_mode<synchronous>, transform_indices = @transform_6, window_bounds = array<i64: 2, 1, 32>}, {pipeline_mode = #tpu.pipeline_mode<synchronous>, transform_indices = @transform_7, window_bounds = array<i64: 2, 1, 32>}, {pipeline_mode = #tpu.pipeline_mode<synchronous>, transform_indices = @transform_8, window_bounds = array<i64: 2, 1, 32>}, {pipeline_mode = #tpu.pipeline_mode<synchronous>, transform_indices = @transform_9, window_bounds = array<i64: 2, 1, 32>}, {pipeline_mode = #tpu.pipeline_mode<synchronous>, transform_indices = @transform_10, window_bounds = array<i64: 2, 1, 32>}, {pipeline_mode = #tpu.pipeline_mode<synchronous>, transform_indices = @transform_11, window_bounds = array<i64: 2, 32, 128>}, {pipeline_mode = #tpu.pipeline_mode<synchronous>, transform_indices = @transform_12, window_bounds = array<i64: 2, 1, 128>}, {pipeline_mode = #tpu.pipeline_mode<synchronous>, transform_indices = @transform_13, window_bounds = array<i64: 2, 128, 32>}, {pipeline_mode = #tpu.pipeline_mode<synchronous>, transform_indices = @transform_14, window_bounds = array<i64: 2, 1, 32>}, {pipeline_mode = #tpu.pipeline_mode<synchronous>, transform_indices = @transform_15, window_bounds = array<i64: 1, 32>}, {pipeline_mode = #tpu.pipeline_mode<synchronous>, transform_indices = @transform_16, window_bounds = array<i64: 1, 32>}, {transform_indices = @transform_17, window_bounds = array<i64: 16, 32>}]} {
    %c0 = arith.constant 0 : index
    %c0_0 = arith.constant 0 : index
    %0 = vector.load %arg1[%c0, %c0_0] : memref<16x32xf32, #tpu.memory_space<vmem>>, vector<16x32xf32>
    %c0_1 = arith.constant 0 : index
    %c0_2 = arith.constant 0 : index
    %1 = vector.load %arg2[%c0_1, %c0_2] : memref<16x16xf32, #tpu.memory_space<vmem>>, vector<16x16xf32>
    %c0_3 = arith.constant 0 : index
    %c0_4 = arith.constant 0 : index
    %2 = vector.load %arg3[%c0_3, %c0_4] : memref<64x32xf32, #tpu.memory_space<vmem>>, vector<64x32xf32>
    %c0_5 = arith.constant 0 : index
    %c0_6 = arith.constant 0 : index
    %c0_7 = arith.constant 0 : index
    %3 = vector.load %arg8[%c0_5, %c0_6, %c0_7] : memref<2x1x32xf32, #tpu.memory_space<vmem>>, vector<1x1x32xf32>
    %4 = vector.shape_cast %3 : vector<1x1x32xf32> to vector<1x32xf32>
    %c0_8 = arith.constant 0 : index
    %c0_9 = arith.constant 0 : index
    %c0_10 = arith.constant 0 : index
    %5 = vector.load %arg9[%c0_8, %c0_9, %c0_10] : memref<2x1x32xf32, #tpu.memory_space<vmem>>, vector<1x1x32xf32>
    %6 = vector.shape_cast %5 : vector<1x1x32xf32> to vector<1x32xf32>
    %cst = arith.constant dense<0.000000e+00> : vector<16xf32>
    %7 = vector.multi_reduction <add>, %0, %cst [1] : vector<16x32xf32> to vector<16xf32>
    %8 = vector.shape_cast %7 : vector<16xf32> to vector<16x1xf32>
    %cst_11 = arith.constant 3.200000e+01 : f32
    %9 = vector.broadcast %cst_11 : f32 to vector<16x1xf32>
    %10 = arith.divf %8, %9 : vector<16x1xf32>
    %11 = vector.broadcast %10 : vector<16x1xf32> to vector<16x32xf32>
    %12 = arith.subf %0, %11 : vector<16x32xf32>
    %13 = arith.mulf %12, %12 : vector<16x32xf32>
    %cst_12 = arith.constant dense<0.000000e+00> : vector<16xf32>
    %14 = vector.multi_reduction <add>, %13, %cst_12 [1] : vector<16x32xf32> to vector<16xf32>
    %15 = vector.shape_cast %14 : vector<16xf32> to vector<16x1xf32>
    %cst_13 = arith.constant 3.200000e+01 : f32
    %16 = vector.broadcast %cst_13 : f32 to vector<16x1xf32>
    %17 = arith.divf %15, %16 : vector<16x1xf32>
    %18 = vector.broadcast %10 : vector<16x1xf32> to vector<16x32xf32>
    %19 = arith.subf %0, %18 : vector<16x32xf32>
    %cst_14 = arith.constant 9.99999974E-6 : f32
    %20 = vector.broadcast %cst_14 : f32 to vector<16x1xf32>
    %21 = arith.addf %17, %20 : vector<16x1xf32>
    %22 = math.rsqrt %21 : vector<16x1xf32>
    %23 = vector.broadcast %22 : vector<16x1xf32> to vector<16x32xf32>
    %24 = arith.mulf %19, %23 : vector<16x32xf32>
    %25 = vector.broadcast %4 : vector<1x32xf32> to vector<16x32xf32>
    %26 = arith.mulf %24, %25 : vector<16x32xf32>
    %27 = vector.broadcast %6 : vector<1x32xf32> to vector<16x32xf32>
    %28 = arith.addf %26, %27 : vector<16x32xf32>
    %29 = arith.truncf %28 : vector<16x32xf32> to vector<16x32xbf16>
    %c0_15 = arith.constant 0 : index
    %c0_16 = arith.constant 0 : index
    %c0_17 = arith.constant 0 : index
    %30 = vector.load %arg4[%c0_15, %c0_16, %c0_17] : memref<2x32x128xbf16, #tpu.memory_space<vmem>>, vector<1x32x128xbf16>
    %31 = vector.shape_cast %30 : vector<1x32x128xbf16> to vector<32x128xbf16>
    %cst_18 = arith.constant dense<0.000000e+00> : vector<16x128xf32>
    %32 = tpu.matmul %29, %31, %cst_18 {dimension_numbers = #tpu.dot_dimension_numbers<[1], [0], [0], [1], [0, 0, 1, 1], [], []>} : vector<16x32xbf16>, vector<32x128xbf16>, vector<16x128xf32> -> vector<16x128xf32>
    %c0_19 = arith.constant 0 : index
    %c0_20 = arith.constant 0 : index
    %c0_21 = arith.constant 0 : index
    %33 = vector.load %arg5[%c0_19, %c0_20, %c0_21] : memref<2x1x128xf32, #tpu.memory_space<vmem>>, vector<1x1x128xf32>
    %34 = vector.shape_cast %33 : vector<1x1x128xf32> to vector<1x128xf32>
    %35 = vector.broadcast %34 : vector<1x128xf32> to vector<16x128xf32>
    %36 = arith.addf %32, %35 : vector<16x128xf32>
    %37 = vector.extract_strided_slice %36 {offsets = [0, 0], sizes = [16, 32], strides = [1, 1]} : vector<16x128xf32> to vector<16x32xf32>
    %38 = vector.extract_strided_slice %36 {offsets = [0, 32], sizes = [16, 32], strides = [1, 1]} : vector<16x128xf32> to vector<16x32xf32>
    %39 = vector.extract_strided_slice %36 {offsets = [0, 64], sizes = [16, 32], strides = [1, 1]} : vector<16x128xf32> to vector<16x32xf32>
    %40 = arith.truncf %37 : vector<16x32xf32> to vector<16x32xbf16>
    %41 = tpu.concatenate %38, %38, %38, %38 in 0 : vector<16x32xf32>, vector<16x32xf32>, vector<16x32xf32>, vector<16x32xf32> -> vector<64x32xf32>
    %42 = arith.mulf %41, %2 : vector<64x32xf32>
    %43 = arith.truncf %42 : vector<64x32xf32> to vector<64x32xbf16>
    %44 = tpu.concatenate %39, %39, %39, %39 in 0 : vector<16x32xf32>, vector<16x32xf32>, vector<16x32xf32>, vector<16x32xf32> -> vector<64x32xf32>
    %45 = arith.mulf %44, %2 : vector<64x32xf32>
    %46 = arith.truncf %45 : vector<64x32xf32> to vector<64x32xbf16>
    %cst_22 = arith.constant dense<0.000000e+00> : vector<16x64xf32>
    %47 = tpu.matmul %40, %43, %cst_22 {dimension_numbers = #tpu.dot_dimension_numbers<[1], [1], [0], [0], [0, 0, 1, 0], [], []>} : vector<16x32xbf16>, vector<64x32xbf16>, vector<16x64xf32> -> vector<16x64xf32>
    %48 = vector.extract_strided_slice %47 {offsets = [0, 0], sizes = [16, 16], strides = [1, 1]} : vector<16x64xf32> to vector<16x16xf32>
    %49 = arith.addf %48, %1 : vector<16x16xf32>
    %cst_23 = arith.constant dense<0xFF800000> : vector<16xf32>
    %50 = vector.multi_reduction <maximumf>, %49, %cst_23 [1] : vector<16x16xf32> to vector<16xf32>
    %51 = vector.shape_cast %50 : vector<16xf32> to vector<16x1xf32>
    %52 = vector.broadcast %51 : vector<16x1xf32> to vector<16x16xf32>
    %53 = arith.subf %49, %52 : vector<16x16xf32>
    %54 = math.exp %53 : vector<16x16xf32>
    %cst_24 = arith.constant dense<0.000000e+00> : vector<16xf32>
    %55 = vector.multi_reduction <add>, %54, %cst_24 [1] : vector<16x16xf32> to vector<16xf32>
    %56 = vector.shape_cast %55 : vector<16xf32> to vector<16x1xf32>
    %57 = tpu.reciprocal %56 {approx = true} : vector<16x1xf32> -> vector<16x1xf32>
    %58 = vector.broadcast %57 : vector<16x1xf32> to vector<16x16xf32>
    %59 = arith.mulf %54, %58 : vector<16x16xf32>
    %60 = vector.extract_strided_slice %47 {offsets = [0, 16], sizes = [16, 16], strides = [1, 1]} : vector<16x64xf32> to vector<16x16xf32>
    %61 = arith.addf %60, %1 : vector<16x16xf32>
    %cst_25 = arith.constant dense<0xFF800000> : vector<16xf32>
    %62 = vector.multi_reduction <maximumf>, %61, %cst_25 [1] : vector<16x16xf32> to vector<16xf32>
    %63 = vector.shape_cast %62 : vector<16xf32> to vector<16x1xf32>
    %64 = vector.broadcast %63 : vector<16x1xf32> to vector<16x16xf32>
    %65 = arith.subf %61, %64 : vector<16x16xf32>
    %66 = math.exp %65 : vector<16x16xf32>
    %cst_26 = arith.constant dense<0.000000e+00> : vector<16xf32>
    %67 = vector.multi_reduction <add>, %66, %cst_26 [1] : vector<16x16xf32> to vector<16xf32>
    %68 = vector.shape_cast %67 : vector<16xf32> to vector<16x1xf32>
    %69 = tpu.reciprocal %68 {approx = true} : vector<16x1xf32> -> vector<16x1xf32>
    %70 = vector.broadcast %69 : vector<16x1xf32> to vector<16x16xf32>
    %71 = arith.mulf %66, %70 : vector<16x16xf32>
    %72 = vector.extract_strided_slice %47 {offsets = [0, 32], sizes = [16, 16], strides = [1, 1]} : vector<16x64xf32> to vector<16x16xf32>
    %73 = arith.addf %72, %1 : vector<16x16xf32>
    %cst_27 = arith.constant dense<0xFF800000> : vector<16xf32>
    %74 = vector.multi_reduction <maximumf>, %73, %cst_27 [1] : vector<16x16xf32> to vector<16xf32>
    %75 = vector.shape_cast %74 : vector<16xf32> to vector<16x1xf32>
    %76 = vector.broadcast %75 : vector<16x1xf32> to vector<16x16xf32>
    %77 = arith.subf %73, %76 : vector<16x16xf32>
    %78 = math.exp %77 : vector<16x16xf32>
    %cst_28 = arith.constant dense<0.000000e+00> : vector<16xf32>
    %79 = vector.multi_reduction <add>, %78, %cst_28 [1] : vector<16x16xf32> to vector<16xf32>
    %80 = vector.shape_cast %79 : vector<16xf32> to vector<16x1xf32>
    %81 = tpu.reciprocal %80 {approx = true} : vector<16x1xf32> -> vector<16x1xf32>
    %82 = vector.broadcast %81 : vector<16x1xf32> to vector<16x16xf32>
    %83 = arith.mulf %78, %82 : vector<16x16xf32>
    %84 = vector.extract_strided_slice %47 {offsets = [0, 48], sizes = [16, 16], strides = [1, 1]} : vector<16x64xf32> to vector<16x16xf32>
    %85 = arith.addf %84, %1 : vector<16x16xf32>
    %cst_29 = arith.constant dense<0xFF800000> : vector<16xf32>
    %86 = vector.multi_reduction <maximumf>, %85, %cst_29 [1] : vector<16x16xf32> to vector<16xf32>
    %87 = vector.shape_cast %86 : vector<16xf32> to vector<16x1xf32>
    %88 = vector.broadcast %87 : vector<16x1xf32> to vector<16x16xf32>
    %89 = arith.subf %85, %88 : vector<16x16xf32>
    %90 = math.exp %89 : vector<16x16xf32>
    %cst_30 = arith.constant dense<0.000000e+00> : vector<16xf32>
    %91 = vector.multi_reduction <add>, %90, %cst_30 [1] : vector<16x16xf32> to vector<16xf32>
    %92 = vector.shape_cast %91 : vector<16xf32> to vector<16x1xf32>
    %93 = tpu.reciprocal %92 {approx = true} : vector<16x1xf32> -> vector<16x1xf32>
    %94 = vector.broadcast %93 : vector<16x1xf32> to vector<16x16xf32>
    %95 = arith.mulf %90, %94 : vector<16x16xf32>
    %96 = tpu.concatenate %59, %71, %83, %95 in 1 : vector<16x16xf32>, vector<16x16xf32>, vector<16x16xf32>, vector<16x16xf32> -> vector<16x64xf32>
    %97 = arith.truncf %96 : vector<16x64xf32> to vector<16x64xbf16>
    %cst_31 = arith.constant dense<0.000000e+00> : vector<16x32xf32>
    %98 = tpu.matmul %97, %46, %cst_31 {dimension_numbers = #tpu.dot_dimension_numbers<[1], [0], [0], [1], [0, 0, 1, 1], [], []>} : vector<16x64xbf16>, vector<64x32xbf16>, vector<16x32xf32> -> vector<16x32xf32>
    %99 = arith.truncf %98 : vector<16x32xf32> to vector<16x32xbf16>
    %c0_32 = arith.constant 0 : index
    %c0_33 = arith.constant 0 : index
    %c0_34 = arith.constant 0 : index
    %100 = vector.load %arg6[%c0_32, %c0_33, %c0_34] : memref<2x32x32xbf16, #tpu.memory_space<vmem>>, vector<1x32x32xbf16>
    %101 = vector.shape_cast %100 : vector<1x32x32xbf16> to vector<32x32xbf16>
    %cst_35 = arith.constant dense<0.000000e+00> : vector<16x32xf32>
    %102 = tpu.matmul %99, %101, %cst_35 {dimension_numbers = #tpu.dot_dimension_numbers<[1], [0], [0], [1], [0, 0, 1, 1], [], []>} : vector<16x32xbf16>, vector<32x32xbf16>, vector<16x32xf32> -> vector<16x32xf32>
    %103 = arith.addf %0, %102 : vector<16x32xf32>
    %c0_36 = arith.constant 0 : index
    %c0_37 = arith.constant 0 : index
    %c0_38 = arith.constant 0 : index
    %104 = vector.load %arg7[%c0_36, %c0_37, %c0_38] : memref<2x1x32xf32, #tpu.memory_space<vmem>>, vector<1x1x32xf32>
    %105 = vector.shape_cast %104 : vector<1x1x32xf32> to vector<1x32xf32>
    %106 = vector.broadcast %105 : vector<1x32xf32> to vector<16x32xf32>
    %107 = arith.addf %103, %106 : vector<16x32xf32>
    %c0_39 = arith.constant 0 : index
    %c0_40 = arith.constant 0 : index
    %c0_41 = arith.constant 0 : index
    %108 = vector.load %arg10[%c0_39, %c0_40, %c0_41] : memref<2x1x32xf32, #tpu.memory_space<vmem>>, vector<1x1x32xf32>
    %109 = vector.shape_cast %108 : vector<1x1x32xf32> to vector<1x32xf32>
    %c0_42 = arith.constant 0 : index
    %c0_43 = arith.constant 0 : index
    %c0_44 = arith.constant 0 : index
    %110 = vector.load %arg11[%c0_42, %c0_43, %c0_44] : memref<2x1x32xf32, #tpu.memory_space<vmem>>, vector<1x1x32xf32>
    %111 = vector.shape_cast %110 : vector<1x1x32xf32> to vector<1x32xf32>
    %cst_45 = arith.constant dense<0.000000e+00> : vector<16xf32>
    %112 = vector.multi_reduction <add>, %107, %cst_45 [1] : vector<16x32xf32> to vector<16xf32>
    %113 = vector.shape_cast %112 : vector<16xf32> to vector<16x1xf32>
    %cst_46 = arith.constant 3.200000e+01 : f32
    %114 = vector.broadcast %cst_46 : f32 to vector<16x1xf32>
    %115 = arith.divf %113, %114 : vector<16x1xf32>
    %116 = vector.broadcast %115 : vector<16x1xf32> to vector<16x32xf32>
    %117 = arith.subf %107, %116 : vector<16x32xf32>
    %118 = arith.mulf %117, %117 : vector<16x32xf32>
    %cst_47 = arith.constant dense<0.000000e+00> : vector<16xf32>
    %119 = vector.multi_reduction <add>, %118, %cst_47 [1] : vector<16x32xf32> to vector<16xf32>
    %120 = vector.shape_cast %119 : vector<16xf32> to vector<16x1xf32>
    %cst_48 = arith.constant 3.200000e+01 : f32
    %121 = vector.broadcast %cst_48 : f32 to vector<16x1xf32>
    %122 = arith.divf %120, %121 : vector<16x1xf32>
    %123 = vector.broadcast %115 : vector<16x1xf32> to vector<16x32xf32>
    %124 = arith.subf %107, %123 : vector<16x32xf32>
    %cst_49 = arith.constant 9.99999974E-6 : f32
    %125 = vector.broadcast %cst_49 : f32 to vector<16x1xf32>
    %126 = arith.addf %122, %125 : vector<16x1xf32>
    %127 = math.rsqrt %126 : vector<16x1xf32>
    %128 = vector.broadcast %127 : vector<16x1xf32> to vector<16x32xf32>
    %129 = arith.mulf %124, %128 : vector<16x32xf32>
    %130 = vector.broadcast %109 : vector<1x32xf32> to vector<16x32xf32>
    %131 = arith.mulf %129, %130 : vector<16x32xf32>
    %132 = vector.broadcast %111 : vector<1x32xf32> to vector<16x32xf32>
    %133 = arith.addf %131, %132 : vector<16x32xf32>
    %134 = arith.truncf %133 : vector<16x32xf32> to vector<16x32xbf16>
    %c0_50 = arith.constant 0 : index
    %c0_51 = arith.constant 0 : index
    %c0_52 = arith.constant 0 : index
    %135 = vector.load %arg12[%c0_50, %c0_51, %c0_52] : memref<2x32x128xbf16, #tpu.memory_space<vmem>>, vector<1x32x128xbf16>
    %136 = vector.shape_cast %135 : vector<1x32x128xbf16> to vector<32x128xbf16>
    %cst_53 = arith.constant dense<0.000000e+00> : vector<16x128xf32>
    %137 = tpu.matmul %134, %136, %cst_53 {dimension_numbers = #tpu.dot_dimension_numbers<[1], [0], [0], [1], [0, 0, 1, 1], [], []>} : vector<16x32xbf16>, vector<32x128xbf16>, vector<16x128xf32> -> vector<16x128xf32>
    %c0_54 = arith.constant 0 : index
    %c0_55 = arith.constant 0 : index
    %c0_56 = arith.constant 0 : index
    %138 = vector.load %arg13[%c0_54, %c0_55, %c0_56] : memref<2x1x128xf32, #tpu.memory_space<vmem>>, vector<1x1x128xf32>
    %139 = vector.shape_cast %138 : vector<1x1x128xf32> to vector<1x128xf32>
    %140 = vector.broadcast %139 : vector<1x128xf32> to vector<16x128xf32>
    %141 = arith.addf %137, %140 : vector<16x128xf32>
    %cst_57 = arith.constant 0.707106769 : f32
    %142 = vector.broadcast %cst_57 : f32 to vector<16x128xf32>
    %143 = arith.mulf %141, %142 : vector<16x128xf32>
    %144 = math.absf %143 : vector<16x128xf32>
    %cst_58 = arith.constant 0.327591091 : f32
    %145 = vector.broadcast %cst_58 : f32 to vector<16x128xf32>
    %146 = arith.mulf %145, %144 : vector<16x128xf32>
    %cst_59 = arith.constant 1.000000e+00 : f32
    %147 = vector.broadcast %cst_59 : f32 to vector<16x128xf32>
    %148 = arith.addf %147, %146 : vector<16x128xf32>
    %cst_60 = arith.constant 1.000000e+00 : f32
    %149 = vector.broadcast %cst_60 : f32 to vector<16x128xf32>
    %150 = arith.divf %149, %148 : vector<16x128xf32>
    %cst_61 = arith.constant 1.06140542 : f32
    %151 = vector.broadcast %cst_61 : f32 to vector<16x128xf32>
    %152 = arith.mulf %150, %151 : vector<16x128xf32>
    %cst_62 = arith.constant -1.45315206 : f32
    %153 = vector.broadcast %cst_62 : f32 to vector<16x128xf32>
    %154 = arith.addf %153, %152 : vector<16x128xf32>
    %155 = arith.mulf %150, %154 : vector<16x128xf32>
    %cst_63 = arith.constant 1.42141378 : f32
    %156 = vector.broadcast %cst_63 : f32 to vector<16x128xf32>
    %157 = arith.addf %156, %155 : vector<16x128xf32>
    %158 = arith.mulf %150, %157 : vector<16x128xf32>
    %cst_64 = arith.constant -0.284496725 : f32
    %159 = vector.broadcast %cst_64 : f32 to vector<16x128xf32>
    %160 = arith.addf %159, %158 : vector<16x128xf32>
    %161 = arith.mulf %150, %160 : vector<16x128xf32>
    %cst_65 = arith.constant 0.254829586 : f32
    %162 = vector.broadcast %cst_65 : f32 to vector<16x128xf32>
    %163 = arith.addf %162, %161 : vector<16x128xf32>
    %164 = arith.mulf %150, %163 : vector<16x128xf32>
    %cst_66 = arith.constant 0.000000e+00 : f32
    %165 = vector.broadcast %cst_66 : f32 to vector<16x128xf32>
    %166 = arith.subf %165, %144 : vector<16x128xf32>
    %167 = arith.mulf %166, %144 : vector<16x128xf32>
    %168 = math.exp %167 : vector<16x128xf32>
    %169 = arith.mulf %164, %168 : vector<16x128xf32>
    %cst_67 = arith.constant 1.000000e+00 : f32
    %170 = vector.broadcast %cst_67 : f32 to vector<16x128xf32>
    %171 = arith.subf %170, %169 : vector<16x128xf32>
    %cst_68 = arith.constant 0.000000e+00 : f32
    %172 = vector.broadcast %cst_68 : f32 to vector<16x128xf32>
    %173 = arith.cmpf olt, %143, %172 : vector<16x128xf32>
    %cst_69 = arith.constant 0.000000e+00 : f32
    %174 = vector.broadcast %cst_69 : f32 to vector<16x128xf32>
    %175 = arith.subf %174, %171 : vector<16x128xf32>
    %176 = arith.select %173, %175, %171 : vector<16x128xi1>, vector<16x128xf32>
    %cst_70 = arith.constant 5.000000e-01 : f32
    %177 = vector.broadcast %cst_70 : f32 to vector<16x128xf32>
    %178 = arith.mulf %177, %141 : vector<16x128xf32>
    %cst_71 = arith.constant 1.000000e+00 : f32
    %179 = vector.broadcast %cst_71 : f32 to vector<16x128xf32>
    %180 = arith.addf %179, %176 : vector<16x128xf32>
    %181 = arith.mulf %178, %180 : vector<16x128xf32>
    %182 = arith.truncf %181 : vector<16x128xf32> to vector<16x128xbf16>
    %c0_72 = arith.constant 0 : index
    %c0_73 = arith.constant 0 : index
    %c0_74 = arith.constant 0 : index
    %183 = vector.load %arg14[%c0_72, %c0_73, %c0_74] : memref<2x128x32xbf16, #tpu.memory_space<vmem>>, vector<1x128x32xbf16>
    %184 = vector.shape_cast %183 : vector<1x128x32xbf16> to vector<128x32xbf16>
    %cst_75 = arith.constant dense<0.000000e+00> : vector<16x32xf32>
    %185 = tpu.matmul %182, %184, %cst_75 {dimension_numbers = #tpu.dot_dimension_numbers<[1], [0], [0], [1], [0, 0, 1, 1], [], []>} : vector<16x128xbf16>, vector<128x32xbf16>, vector<16x32xf32> -> vector<16x32xf32>
    %c0_76 = arith.constant 0 : index
    %c0_77 = arith.constant 0 : index
    %c0_78 = arith.constant 0 : index
    %186 = vector.load %arg15[%c0_76, %c0_77, %c0_78] : memref<2x1x32xf32, #tpu.memory_space<vmem>>, vector<1x1x32xf32>
    %187 = vector.shape_cast %186 : vector<1x1x32xf32> to vector<1x32xf32>
    %188 = vector.broadcast %187 : vector<1x32xf32> to vector<16x32xf32>
    %189 = arith.addf %185, %188 : vector<16x32xf32>
    %190 = arith.addf %107, %189 : vector<16x32xf32>
    %c1 = arith.constant 1 : index
    %c0_79 = arith.constant 0 : index
    %c0_80 = arith.constant 0 : index
    %191 = vector.load %arg8[%c1, %c0_79, %c0_80] : memref<2x1x32xf32, #tpu.memory_space<vmem>>, vector<1x1x32xf32>
    %192 = vector.shape_cast %191 : vector<1x1x32xf32> to vector<1x32xf32>
    %c1_81 = arith.constant 1 : index
    %c0_82 = arith.constant 0 : index
    %c0_83 = arith.constant 0 : index
    %193 = vector.load %arg9[%c1_81, %c0_82, %c0_83] : memref<2x1x32xf32, #tpu.memory_space<vmem>>, vector<1x1x32xf32>
    %194 = vector.shape_cast %193 : vector<1x1x32xf32> to vector<1x32xf32>
    %cst_84 = arith.constant dense<0.000000e+00> : vector<16xf32>
    %195 = vector.multi_reduction <add>, %190, %cst_84 [1] : vector<16x32xf32> to vector<16xf32>
    %196 = vector.shape_cast %195 : vector<16xf32> to vector<16x1xf32>
    %cst_85 = arith.constant 3.200000e+01 : f32
    %197 = vector.broadcast %cst_85 : f32 to vector<16x1xf32>
    %198 = arith.divf %196, %197 : vector<16x1xf32>
    %199 = vector.broadcast %198 : vector<16x1xf32> to vector<16x32xf32>
    %200 = arith.subf %190, %199 : vector<16x32xf32>
    %201 = arith.mulf %200, %200 : vector<16x32xf32>
    %cst_86 = arith.constant dense<0.000000e+00> : vector<16xf32>
    %202 = vector.multi_reduction <add>, %201, %cst_86 [1] : vector<16x32xf32> to vector<16xf32>
    %203 = vector.shape_cast %202 : vector<16xf32> to vector<16x1xf32>
    %cst_87 = arith.constant 3.200000e+01 : f32
    %204 = vector.broadcast %cst_87 : f32 to vector<16x1xf32>
    %205 = arith.divf %203, %204 : vector<16x1xf32>
    %206 = vector.broadcast %198 : vector<16x1xf32> to vector<16x32xf32>
    %207 = arith.subf %190, %206 : vector<16x32xf32>
    %cst_88 = arith.constant 9.99999974E-6 : f32
    %208 = vector.broadcast %cst_88 : f32 to vector<16x1xf32>
    %209 = arith.addf %205, %208 : vector<16x1xf32>
    %210 = math.rsqrt %209 : vector<16x1xf32>
    %211 = vector.broadcast %210 : vector<16x1xf32> to vector<16x32xf32>
    %212 = arith.mulf %207, %211 : vector<16x32xf32>
    %213 = vector.broadcast %192 : vector<1x32xf32> to vector<16x32xf32>
    %214 = arith.mulf %212, %213 : vector<16x32xf32>
    %215 = vector.broadcast %194 : vector<1x32xf32> to vector<16x32xf32>
    %216 = arith.addf %214, %215 : vector<16x32xf32>
    %217 = arith.truncf %216 : vector<16x32xf32> to vector<16x32xbf16>
    %c1_89 = arith.constant 1 : index
    %c0_90 = arith.constant 0 : index
    %c0_91 = arith.constant 0 : index
    %218 = vector.load %arg4[%c1_89, %c0_90, %c0_91] : memref<2x32x128xbf16, #tpu.memory_space<vmem>>, vector<1x32x128xbf16>
    %219 = vector.shape_cast %218 : vector<1x32x128xbf16> to vector<32x128xbf16>
    %cst_92 = arith.constant dense<0.000000e+00> : vector<16x128xf32>
    %220 = tpu.matmul %217, %219, %cst_92 {dimension_numbers = #tpu.dot_dimension_numbers<[1], [0], [0], [1], [0, 0, 1, 1], [], []>} : vector<16x32xbf16>, vector<32x128xbf16>, vector<16x128xf32> -> vector<16x128xf32>
    %c1_93 = arith.constant 1 : index
    %c0_94 = arith.constant 0 : index
    %c0_95 = arith.constant 0 : index
    %221 = vector.load %arg5[%c1_93, %c0_94, %c0_95] : memref<2x1x128xf32, #tpu.memory_space<vmem>>, vector<1x1x128xf32>
    %222 = vector.shape_cast %221 : vector<1x1x128xf32> to vector<1x128xf32>
    %223 = vector.broadcast %222 : vector<1x128xf32> to vector<16x128xf32>
    %224 = arith.addf %220, %223 : vector<16x128xf32>
    %225 = vector.extract_strided_slice %224 {offsets = [0, 0], sizes = [16, 32], strides = [1, 1]} : vector<16x128xf32> to vector<16x32xf32>
    %226 = vector.extract_strided_slice %224 {offsets = [0, 32], sizes = [16, 32], strides = [1, 1]} : vector<16x128xf32> to vector<16x32xf32>
    %227 = vector.extract_strided_slice %224 {offsets = [0, 64], sizes = [16, 32], strides = [1, 1]} : vector<16x128xf32> to vector<16x32xf32>
    %228 = arith.truncf %225 : vector<16x32xf32> to vector<16x32xbf16>
    %229 = tpu.concatenate %226, %226, %226, %226 in 0 : vector<16x32xf32>, vector<16x32xf32>, vector<16x32xf32>, vector<16x32xf32> -> vector<64x32xf32>
    %230 = arith.mulf %229, %2 : vector<64x32xf32>
    %231 = arith.truncf %230 : vector<64x32xf32> to vector<64x32xbf16>
    %232 = tpu.concatenate %227, %227, %227, %227 in 0 : vector<16x32xf32>, vector<16x32xf32>, vector<16x32xf32>, vector<16x32xf32> -> vector<64x32xf32>
    %233 = arith.mulf %232, %2 : vector<64x32xf32>
    %234 = arith.truncf %233 : vector<64x32xf32> to vector<64x32xbf16>
    %cst_96 = arith.constant dense<0.000000e+00> : vector<16x64xf32>
    %235 = tpu.matmul %228, %231, %cst_96 {dimension_numbers = #tpu.dot_dimension_numbers<[1], [1], [0], [0], [0, 0, 1, 0], [], []>} : vector<16x32xbf16>, vector<64x32xbf16>, vector<16x64xf32> -> vector<16x64xf32>
    %236 = vector.extract_strided_slice %235 {offsets = [0, 0], sizes = [16, 16], strides = [1, 1]} : vector<16x64xf32> to vector<16x16xf32>
    %237 = arith.addf %236, %1 : vector<16x16xf32>
    %cst_97 = arith.constant dense<0xFF800000> : vector<16xf32>
    %238 = vector.multi_reduction <maximumf>, %237, %cst_97 [1] : vector<16x16xf32> to vector<16xf32>
    %239 = vector.shape_cast %238 : vector<16xf32> to vector<16x1xf32>
    %240 = vector.broadcast %239 : vector<16x1xf32> to vector<16x16xf32>
    %241 = arith.subf %237, %240 : vector<16x16xf32>
    %242 = math.exp %241 : vector<16x16xf32>
    %cst_98 = arith.constant dense<0.000000e+00> : vector<16xf32>
    %243 = vector.multi_reduction <add>, %242, %cst_98 [1] : vector<16x16xf32> to vector<16xf32>
    %244 = vector.shape_cast %243 : vector<16xf32> to vector<16x1xf32>
    %245 = tpu.reciprocal %244 {approx = true} : vector<16x1xf32> -> vector<16x1xf32>
    %246 = vector.broadcast %245 : vector<16x1xf32> to vector<16x16xf32>
    %247 = arith.mulf %242, %246 : vector<16x16xf32>
    %248 = vector.extract_strided_slice %235 {offsets = [0, 16], sizes = [16, 16], strides = [1, 1]} : vector<16x64xf32> to vector<16x16xf32>
    %249 = arith.addf %248, %1 : vector<16x16xf32>
    %cst_99 = arith.constant dense<0xFF800000> : vector<16xf32>
    %250 = vector.multi_reduction <maximumf>, %249, %cst_99 [1] : vector<16x16xf32> to vector<16xf32>
    %251 = vector.shape_cast %250 : vector<16xf32> to vector<16x1xf32>
    %252 = vector.broadcast %251 : vector<16x1xf32> to vector<16x16xf32>
    %253 = arith.subf %249, %252 : vector<16x16xf32>
    %254 = math.exp %253 : vector<16x16xf32>
    %cst_100 = arith.constant dense<0.000000e+00> : vector<16xf32>
    %255 = vector.multi_reduction <add>, %254, %cst_100 [1] : vector<16x16xf32> to vector<16xf32>
    %256 = vector.shape_cast %255 : vector<16xf32> to vector<16x1xf32>
    %257 = tpu.reciprocal %256 {approx = true} : vector<16x1xf32> -> vector<16x1xf32>
    %258 = vector.broadcast %257 : vector<16x1xf32> to vector<16x16xf32>
    %259 = arith.mulf %254, %258 : vector<16x16xf32>
    %260 = vector.extract_strided_slice %235 {offsets = [0, 32], sizes = [16, 16], strides = [1, 1]} : vector<16x64xf32> to vector<16x16xf32>
    %261 = arith.addf %260, %1 : vector<16x16xf32>
    %cst_101 = arith.constant dense<0xFF800000> : vector<16xf32>
    %262 = vector.multi_reduction <maximumf>, %261, %cst_101 [1] : vector<16x16xf32> to vector<16xf32>
    %263 = vector.shape_cast %262 : vector<16xf32> to vector<16x1xf32>
    %264 = vector.broadcast %263 : vector<16x1xf32> to vector<16x16xf32>
    %265 = arith.subf %261, %264 : vector<16x16xf32>
    %266 = math.exp %265 : vector<16x16xf32>
    %cst_102 = arith.constant dense<0.000000e+00> : vector<16xf32>
    %267 = vector.multi_reduction <add>, %266, %cst_102 [1] : vector<16x16xf32> to vector<16xf32>
    %268 = vector.shape_cast %267 : vector<16xf32> to vector<16x1xf32>
    %269 = tpu.reciprocal %268 {approx = true} : vector<16x1xf32> -> vector<16x1xf32>
    %270 = vector.broadcast %269 : vector<16x1xf32> to vector<16x16xf32>
    %271 = arith.mulf %266, %270 : vector<16x16xf32>
    %272 = vector.extract_strided_slice %235 {offsets = [0, 48], sizes = [16, 16], strides = [1, 1]} : vector<16x64xf32> to vector<16x16xf32>
    %273 = arith.addf %272, %1 : vector<16x16xf32>
    %cst_103 = arith.constant dense<0xFF800000> : vector<16xf32>
    %274 = vector.multi_reduction <maximumf>, %273, %cst_103 [1] : vector<16x16xf32> to vector<16xf32>
    %275 = vector.shape_cast %274 : vector<16xf32> to vector<16x1xf32>
    %276 = vector.broadcast %275 : vector<16x1xf32> to vector<16x16xf32>
    %277 = arith.subf %273, %276 : vector<16x16xf32>
    %278 = math.exp %277 : vector<16x16xf32>
    %cst_104 = arith.constant dense<0.000000e+00> : vector<16xf32>
    %279 = vector.multi_reduction <add>, %278, %cst_104 [1] : vector<16x16xf32> to vector<16xf32>
    %280 = vector.shape_cast %279 : vector<16xf32> to vector<16x1xf32>
    %281 = tpu.reciprocal %280 {approx = true} : vector<16x1xf32> -> vector<16x1xf32>
    %282 = vector.broadcast %281 : vector<16x1xf32> to vector<16x16xf32>
    %283 = arith.mulf %278, %282 : vector<16x16xf32>
    %284 = tpu.concatenate %247, %259, %271, %283 in 1 : vector<16x16xf32>, vector<16x16xf32>, vector<16x16xf32>, vector<16x16xf32> -> vector<16x64xf32>
    %285 = arith.truncf %284 : vector<16x64xf32> to vector<16x64xbf16>
    %cst_105 = arith.constant dense<0.000000e+00> : vector<16x32xf32>
    %286 = tpu.matmul %285, %234, %cst_105 {dimension_numbers = #tpu.dot_dimension_numbers<[1], [0], [0], [1], [0, 0, 1, 1], [], []>} : vector<16x64xbf16>, vector<64x32xbf16>, vector<16x32xf32> -> vector<16x32xf32>
    %287 = arith.truncf %286 : vector<16x32xf32> to vector<16x32xbf16>
    %c1_106 = arith.constant 1 : index
    %c0_107 = arith.constant 0 : index
    %c0_108 = arith.constant 0 : index
    %288 = vector.load %arg6[%c1_106, %c0_107, %c0_108] : memref<2x32x32xbf16, #tpu.memory_space<vmem>>, vector<1x32x32xbf16>
    %289 = vector.shape_cast %288 : vector<1x32x32xbf16> to vector<32x32xbf16>
    %cst_109 = arith.constant dense<0.000000e+00> : vector<16x32xf32>
    %290 = tpu.matmul %287, %289, %cst_109 {dimension_numbers = #tpu.dot_dimension_numbers<[1], [0], [0], [1], [0, 0, 1, 1], [], []>} : vector<16x32xbf16>, vector<32x32xbf16>, vector<16x32xf32> -> vector<16x32xf32>
    %291 = arith.addf %190, %290 : vector<16x32xf32>
    %c1_110 = arith.constant 1 : index
    %c0_111 = arith.constant 0 : index
    %c0_112 = arith.constant 0 : index
    %292 = vector.load %arg7[%c1_110, %c0_111, %c0_112] : memref<2x1x32xf32, #tpu.memory_space<vmem>>, vector<1x1x32xf32>
    %293 = vector.shape_cast %292 : vector<1x1x32xf32> to vector<1x32xf32>
    %294 = vector.broadcast %293 : vector<1x32xf32> to vector<16x32xf32>
    %295 = arith.addf %291, %294 : vector<16x32xf32>
    %c1_113 = arith.constant 1 : index
    %c0_114 = arith.constant 0 : index
    %c0_115 = arith.constant 0 : index
    %296 = vector.load %arg10[%c1_113, %c0_114, %c0_115] : memref<2x1x32xf32, #tpu.memory_space<vmem>>, vector<1x1x32xf32>
    %297 = vector.shape_cast %296 : vector<1x1x32xf32> to vector<1x32xf32>
    %c1_116 = arith.constant 1 : index
    %c0_117 = arith.constant 0 : index
    %c0_118 = arith.constant 0 : index
    %298 = vector.load %arg11[%c1_116, %c0_117, %c0_118] : memref<2x1x32xf32, #tpu.memory_space<vmem>>, vector<1x1x32xf32>
    %299 = vector.shape_cast %298 : vector<1x1x32xf32> to vector<1x32xf32>
    %cst_119 = arith.constant dense<0.000000e+00> : vector<16xf32>
    %300 = vector.multi_reduction <add>, %295, %cst_119 [1] : vector<16x32xf32> to vector<16xf32>
    %301 = vector.shape_cast %300 : vector<16xf32> to vector<16x1xf32>
    %cst_120 = arith.constant 3.200000e+01 : f32
    %302 = vector.broadcast %cst_120 : f32 to vector<16x1xf32>
    %303 = arith.divf %301, %302 : vector<16x1xf32>
    %304 = vector.broadcast %303 : vector<16x1xf32> to vector<16x32xf32>
    %305 = arith.subf %295, %304 : vector<16x32xf32>
    %306 = arith.mulf %305, %305 : vector<16x32xf32>
    %cst_121 = arith.constant dense<0.000000e+00> : vector<16xf32>
    %307 = vector.multi_reduction <add>, %306, %cst_121 [1] : vector<16x32xf32> to vector<16xf32>
    %308 = vector.shape_cast %307 : vector<16xf32> to vector<16x1xf32>
    %cst_122 = arith.constant 3.200000e+01 : f32
    %309 = vector.broadcast %cst_122 : f32 to vector<16x1xf32>
    %310 = arith.divf %308, %309 : vector<16x1xf32>
    %311 = vector.broadcast %303 : vector<16x1xf32> to vector<16x32xf32>
    %312 = arith.subf %295, %311 : vector<16x32xf32>
    %cst_123 = arith.constant 9.99999974E-6 : f32
    %313 = vector.broadcast %cst_123 : f32 to vector<16x1xf32>
    %314 = arith.addf %310, %313 : vector<16x1xf32>
    %315 = math.rsqrt %314 : vector<16x1xf32>
    %316 = vector.broadcast %315 : vector<16x1xf32> to vector<16x32xf32>
    %317 = arith.mulf %312, %316 : vector<16x32xf32>
    %318 = vector.broadcast %297 : vector<1x32xf32> to vector<16x32xf32>
    %319 = arith.mulf %317, %318 : vector<16x32xf32>
    %320 = vector.broadcast %299 : vector<1x32xf32> to vector<16x32xf32>
    %321 = arith.addf %319, %320 : vector<16x32xf32>
    %322 = arith.truncf %321 : vector<16x32xf32> to vector<16x32xbf16>
    %c1_124 = arith.constant 1 : index
    %c0_125 = arith.constant 0 : index
    %c0_126 = arith.constant 0 : index
    %323 = vector.load %arg12[%c1_124, %c0_125, %c0_126] : memref<2x32x128xbf16, #tpu.memory_space<vmem>>, vector<1x32x128xbf16>
    %324 = vector.shape_cast %323 : vector<1x32x128xbf16> to vector<32x128xbf16>
    %cst_127 = arith.constant dense<0.000000e+00> : vector<16x128xf32>
    %325 = tpu.matmul %322, %324, %cst_127 {dimension_numbers = #tpu.dot_dimension_numbers<[1], [0], [0], [1], [0, 0, 1, 1], [], []>} : vector<16x32xbf16>, vector<32x128xbf16>, vector<16x128xf32> -> vector<16x128xf32>
    %c1_128 = arith.constant 1 : index
    %c0_129 = arith.constant 0 : index
    %c0_130 = arith.constant 0 : index
    %326 = vector.load %arg13[%c1_128, %c0_129, %c0_130] : memref<2x1x128xf32, #tpu.memory_space<vmem>>, vector<1x1x128xf32>
    %327 = vector.shape_cast %326 : vector<1x1x128xf32> to vector<1x128xf32>
    %328 = vector.broadcast %327 : vector<1x128xf32> to vector<16x128xf32>
    %329 = arith.addf %325, %328 : vector<16x128xf32>
    %cst_131 = arith.constant 0.707106769 : f32
    %330 = vector.broadcast %cst_131 : f32 to vector<16x128xf32>
    %331 = arith.mulf %329, %330 : vector<16x128xf32>
    %332 = math.absf %331 : vector<16x128xf32>
    %cst_132 = arith.constant 0.327591091 : f32
    %333 = vector.broadcast %cst_132 : f32 to vector<16x128xf32>
    %334 = arith.mulf %333, %332 : vector<16x128xf32>
    %cst_133 = arith.constant 1.000000e+00 : f32
    %335 = vector.broadcast %cst_133 : f32 to vector<16x128xf32>
    %336 = arith.addf %335, %334 : vector<16x128xf32>
    %cst_134 = arith.constant 1.000000e+00 : f32
    %337 = vector.broadcast %cst_134 : f32 to vector<16x128xf32>
    %338 = arith.divf %337, %336 : vector<16x128xf32>
    %cst_135 = arith.constant 1.06140542 : f32
    %339 = vector.broadcast %cst_135 : f32 to vector<16x128xf32>
    %340 = arith.mulf %338, %339 : vector<16x128xf32>
    %cst_136 = arith.constant -1.45315206 : f32
    %341 = vector.broadcast %cst_136 : f32 to vector<16x128xf32>
    %342 = arith.addf %341, %340 : vector<16x128xf32>
    %343 = arith.mulf %338, %342 : vector<16x128xf32>
    %cst_137 = arith.constant 1.42141378 : f32
    %344 = vector.broadcast %cst_137 : f32 to vector<16x128xf32>
    %345 = arith.addf %344, %343 : vector<16x128xf32>
    %346 = arith.mulf %338, %345 : vector<16x128xf32>
    %cst_138 = arith.constant -0.284496725 : f32
    %347 = vector.broadcast %cst_138 : f32 to vector<16x128xf32>
    %348 = arith.addf %347, %346 : vector<16x128xf32>
    %349 = arith.mulf %338, %348 : vector<16x128xf32>
    %cst_139 = arith.constant 0.254829586 : f32
    %350 = vector.broadcast %cst_139 : f32 to vector<16x128xf32>
    %351 = arith.addf %350, %349 : vector<16x128xf32>
    %352 = arith.mulf %338, %351 : vector<16x128xf32>
    %cst_140 = arith.constant 0.000000e+00 : f32
    %353 = vector.broadcast %cst_140 : f32 to vector<16x128xf32>
    %354 = arith.subf %353, %332 : vector<16x128xf32>
    %355 = arith.mulf %354, %332 : vector<16x128xf32>
    %356 = math.exp %355 : vector<16x128xf32>
    %357 = arith.mulf %352, %356 : vector<16x128xf32>
    %cst_141 = arith.constant 1.000000e+00 : f32
    %358 = vector.broadcast %cst_141 : f32 to vector<16x128xf32>
    %359 = arith.subf %358, %357 : vector<16x128xf32>
    %cst_142 = arith.constant 0.000000e+00 : f32
    %360 = vector.broadcast %cst_142 : f32 to vector<16x128xf32>
    %361 = arith.cmpf olt, %331, %360 : vector<16x128xf32>
    %cst_143 = arith.constant 0.000000e+00 : f32
    %362 = vector.broadcast %cst_143 : f32 to vector<16x128xf32>
    %363 = arith.subf %362, %359 : vector<16x128xf32>
    %364 = arith.select %361, %363, %359 : vector<16x128xi1>, vector<16x128xf32>
    %cst_144 = arith.constant 5.000000e-01 : f32
    %365 = vector.broadcast %cst_144 : f32 to vector<16x128xf32>
    %366 = arith.mulf %365, %329 : vector<16x128xf32>
    %cst_145 = arith.constant 1.000000e+00 : f32
    %367 = vector.broadcast %cst_145 : f32 to vector<16x128xf32>
    %368 = arith.addf %367, %364 : vector<16x128xf32>
    %369 = arith.mulf %366, %368 : vector<16x128xf32>
    %370 = arith.truncf %369 : vector<16x128xf32> to vector<16x128xbf16>
    %c1_146 = arith.constant 1 : index
    %c0_147 = arith.constant 0 : index
    %c0_148 = arith.constant 0 : index
    %371 = vector.load %arg14[%c1_146, %c0_147, %c0_148] : memref<2x128x32xbf16, #tpu.memory_space<vmem>>, vector<1x128x32xbf16>
    %372 = vector.shape_cast %371 : vector<1x128x32xbf16> to vector<128x32xbf16>
    %cst_149 = arith.constant dense<0.000000e+00> : vector<16x32xf32>
    %373 = tpu.matmul %370, %372, %cst_149 {dimension_numbers = #tpu.dot_dimension_numbers<[1], [0], [0], [1], [0, 0, 1, 1], [], []>} : vector<16x128xbf16>, vector<128x32xbf16>, vector<16x32xf32> -> vector<16x32xf32>
    %c1_150 = arith.constant 1 : index
    %c0_151 = arith.constant 0 : index
    %c0_152 = arith.constant 0 : index
    %374 = vector.load %arg15[%c1_150, %c0_151, %c0_152] : memref<2x1x32xf32, #tpu.memory_space<vmem>>, vector<1x1x32xf32>
    %375 = vector.shape_cast %374 : vector<1x1x32xf32> to vector<1x32xf32>
    %376 = vector.broadcast %375 : vector<1x32xf32> to vector<16x32xf32>
    %377 = arith.addf %373, %376 : vector<16x32xf32>
    %378 = arith.addf %295, %377 : vector<16x32xf32>
    %c0_153 = arith.constant 0 : index
    %c0_154 = arith.constant 0 : index
    %379 = vector.load %arg16[%c0_153, %c0_154] : memref<1x32xf32, #tpu.memory_space<vmem>>, vector<1x32xf32>
    %c0_155 = arith.constant 0 : index
    %c0_156 = arith.constant 0 : index
    %380 = vector.load %arg17[%c0_155, %c0_156] : memref<1x32xf32, #tpu.memory_space<vmem>>, vector<1x32xf32>
    %cst_157 = arith.constant dense<0.000000e+00> : vector<16xf32>
    %381 = vector.multi_reduction <add>, %378, %cst_157 [1] : vector<16x32xf32> to vector<16xf32>
    %382 = vector.shape_cast %381 : vector<16xf32> to vector<16x1xf32>
    %cst_158 = arith.constant 3.200000e+01 : f32
    %383 = vector.broadcast %cst_158 : f32 to vector<16x1xf32>
    %384 = arith.divf %382, %383 : vector<16x1xf32>
    %385 = vector.broadcast %384 : vector<16x1xf32> to vector<16x32xf32>
    %386 = arith.subf %378, %385 : vector<16x32xf32>
    %387 = arith.mulf %386, %386 : vector<16x32xf32>
    %cst_159 = arith.constant dense<0.000000e+00> : vector<16xf32>
    %388 = vector.multi_reduction <add>, %387, %cst_159 [1] : vector<16x32xf32> to vector<16xf32>
    %389 = vector.shape_cast %388 : vector<16xf32> to vector<16x1xf32>
    %cst_160 = arith.constant 3.200000e+01 : f32
    %390 = vector.broadcast %cst_160 : f32 to vector<16x1xf32>
    %391 = arith.divf %389, %390 : vector<16x1xf32>
    %392 = vector.broadcast %384 : vector<16x1xf32> to vector<16x32xf32>
    %393 = arith.subf %378, %392 : vector<16x32xf32>
    %cst_161 = arith.constant 9.99999974E-6 : f32
    %394 = vector.broadcast %cst_161 : f32 to vector<16x1xf32>
    %395 = arith.addf %391, %394 : vector<16x1xf32>
    %396 = math.rsqrt %395 : vector<16x1xf32>
    %397 = vector.broadcast %396 : vector<16x1xf32> to vector<16x32xf32>
    %398 = arith.mulf %393, %397 : vector<16x32xf32>
    %399 = vector.broadcast %379 : vector<1x32xf32> to vector<16x32xf32>
    %400 = arith.mulf %398, %399 : vector<16x32xf32>
    %401 = vector.broadcast %380 : vector<1x32xf32> to vector<16x32xf32>
    %402 = arith.addf %400, %401 : vector<16x32xf32>
    %c0_162 = arith.constant 0 : index
    %c0_163 = arith.constant 0 : index
    %403 = vector.load %arg18[%c0_162, %c0_163] : memref<16x32xf32, #tpu.memory_space<vmem>>, vector<16x32xf32>
    tpu.vector_store %arg18[%c0_162, %c0_163], %402 {strides = array<i32>} : memref<16x32xf32, #tpu.memory_space<vmem>>, vector<16x32xf32>,
    return
  }
  func.func @transform_0(%arg0: i32) -> (i32, i32) {
    %c0_i32 = arith.constant 0 : i32
    %c0_i32_0 = arith.constant 0 : i32
    return %arg0, %c0_i32 : i32, i32
  }
  func.func @transform_1(%arg0: i32) -> (i32, i32) {
    %c0_i32 = arith.constant 0 : i32
    %c0_i32_0 = arith.constant 0 : i32
    %c0_i32_1 = arith.constant 0 : i32
    return %c0_i32, %c0_i32_0 : i32, i32
  }
  func.func @transform_2(%arg0: i32) -> (i32, i32) {
    %c0_i32 = arith.constant 0 : i32
    %c0_i32_0 = arith.constant 0 : i32
    %c0_i32_1 = arith.constant 0 : i32
    return %c0_i32, %c0_i32_0 : i32, i32
  }
  func.func @transform_3(%arg0: i32) -> (i32, i32, i32) {
    %c0_i32 = arith.constant 0 : i32
    %c0_i32_0 = arith.constant 0 : i32
    %c0_i32_1 = arith.constant 0 : i32
    %c0_i32_2 = arith.constant 0 : i32
    return %c0_i32, %c0_i32_0, %c0_i32_1 : i32, i32, i32
  }
  func.func @transform_4(%arg0: i32) -> (i32, i32, i32) {
    %c0_i32 = arith.constant 0 : i32
    %c0_i32_0 = arith.constant 0 : i32
    %c0_i32_1 = arith.constant 0 : i32
    %c0_i32_2 = arith.constant 0 : i32
    return %c0_i32, %c0_i32_0, %c0_i32_1 : i32, i32, i32
  }
  func.func @transform_5(%arg0: i32) -> (i32, i32, i32) {
    %c0_i32 = arith.constant 0 : i32
    %c0_i32_0 = arith.constant 0 : i32
    %c0_i32_1 = arith.constant 0 : i32
    %c0_i32_2 = arith.constant 0 : i32
    return %c0_i32, %c0_i32_0, %c0_i32_1 : i32, i32, i32
  }
  func.func @transform_6(%arg0: i32) -> (i32, i32, i32) {
    %c0_i32 = arith.constant 0 : i32
    %c0_i32_0 = arith.constant 0 : i32
    %c0_i32_1 = arith.constant 0 : i32
    %c0_i32_2 = arith.constant 0 : i32
    return %c0_i32, %c0_i32_0, %c0_i32_1 : i32, i32, i32
  }
  func.func @transform_7(%arg0: i32) -> (i32, i32, i32) {
    %c0_i32 = arith.constant 0 : i32
    %c0_i32_0 = arith.constant 0 : i32
    %c0_i32_1 = arith.constant 0 : i32
    %c0_i32_2 = arith.constant 0 : i32
    return %c0_i32, %c0_i32_0, %c0_i32_1 : i32, i32, i32
  }
  func.func @transform_8(%arg0: i32) -> (i32, i32, i32) {
    %c0_i32 = arith.constant 0 : i32
    %c0_i32_0 = arith.constant 0 : i32
    %c0_i32_1 = arith.constant 0 : i32
    %c0_i32_2 = arith.constant 0 : i32
    return %c0_i32, %c0_i32_0, %c0_i32_1 : i32, i32, i32
  }
  func.func @transform_9(%arg0: i32) -> (i32, i32, i32) {
    %c0_i32 = arith.constant 0 : i32
    %c0_i32_0 = arith.constant 0 : i32
    %c0_i32_1 = arith.constant 0 : i32
    %c0_i32_2 = arith.constant 0 : i32
    return %c0_i32, %c0_i32_0, %c0_i32_1 : i32, i32, i32
  }
  func.func @transform_10(%arg0: i32) -> (i32, i32, i32) {
    %c0_i32 = arith.constant 0 : i32
    %c0_i32_0 = arith.constant 0 : i32
    %c0_i32_1 = arith.constant 0 : i32
    %c0_i32_2 = arith.constant 0 : i32
    return %c0_i32, %c0_i32_0, %c0_i32_1 : i32, i32, i32
  }
  func.func @transform_11(%arg0: i32) -> (i32, i32, i32) {
    %c0_i32 = arith.constant 0 : i32
    %c0_i32_0 = arith.constant 0 : i32
    %c0_i32_1 = arith.constant 0 : i32
    %c0_i32_2 = arith.constant 0 : i32
    return %c0_i32, %c0_i32_0, %c0_i32_1 : i32, i32, i32
  }
  func.func @transform_12(%arg0: i32) -> (i32, i32, i32) {
    %c0_i32 = arith.constant 0 : i32
    %c0_i32_0 = arith.constant 0 : i32
    %c0_i32_1 = arith.constant 0 : i32
    %c0_i32_2 = arith.constant 0 : i32
    return %c0_i32, %c0_i32_0, %c0_i32_1 : i32, i32, i32
  }
  func.func @transform_13(%arg0: i32) -> (i32, i32, i32) {
    %c0_i32 = arith.constant 0 : i32
    %c0_i32_0 = arith.constant 0 : i32
    %c0_i32_1 = arith.constant 0 : i32
    %c0_i32_2 = arith.constant 0 : i32
    return %c0_i32, %c0_i32_0, %c0_i32_1 : i32, i32, i32
  }
  func.func @transform_14(%arg0: i32) -> (i32, i32, i32) {
    %c0_i32 = arith.constant 0 : i32
    %c0_i32_0 = arith.constant 0 : i32
    %c0_i32_1 = arith.constant 0 : i32
    %c0_i32_2 = arith.constant 0 : i32
    return %c0_i32, %c0_i32_0, %c0_i32_1 : i32, i32, i32
  }
  func.func @transform_15(%arg0: i32) -> (i32, i32) {
    %c0_i32 = arith.constant 0 : i32
    %c0_i32_0 = arith.constant 0 : i32
    %c0_i32_1 = arith.constant 0 : i32
    return %c0_i32, %c0_i32_0 : i32, i32
  }
  func.func @transform_16(%arg0: i32) -> (i32, i32) {
    %c0_i32 = arith.constant 0 : i32
    %c0_i32_0 = arith.constant 0 : i32
    %c0_i32_1 = arith.constant 0 : i32
    return %c0_i32, %c0_i32_0 : i32, i32
  }
  func.func @transform_17(%arg0: i32) -> (i32, i32) {
    %c0_i32 = arith.constant 0 : i32
    %c0_i32_0 = arith.constant 0 : i32
    return %arg0, %c0_i32 : i32, i32
  }
}

</mosaic_0001>

<llo_original>
// kernel: tpu_custom_call.1
$region0: #{tpu_custom_call.1}
  #allocation0 [shape = 'u32[]', space=smem, size = 0x4, offset = 0x4, fixed_abs, tag = 'smem constant byte address 0x4 - core index']
  #allocation1 [shape = 'u32[144,128]{1,0:T(1,128)}', space=vmem, size = 0x12000, scoped, tag = 'internal scratch']
  %s0 = inlined_call_operand.vmem [shape: f32[16,32], index: 0, kind: input, shape index: {}]
  %s1 = inlined_call_operand.vmem [shape: f32[16,16], index: 1, kind: input, shape index: {}]
  %s2 = inlined_call_operand.vmem [shape: f32[64,32], index: 2, kind: input, shape index: {}]
  %s3 = inlined_call_operand.vmem [shape: bf16[2,32,128], index: 3, kind: input, shape index: {}]
  %s4 = inlined_call_operand.vmem [shape: f32[2,1,128], index: 4, kind: input, shape index: {}]
  %s5 = inlined_call_operand.vmem [shape: bf16[2,32,32], index: 5, kind: input, shape index: {}]
  %s6 = inlined_call_operand.vmem [shape: f32[2,1,32], index: 6, kind: input, shape index: {}]
  %s7 = inlined_call_operand.vmem [shape: f32[2,1,32], index: 7, kind: input, shape index: {}]
  %s8 = inlined_call_operand.vmem [shape: f32[2,1,32], index: 8, kind: input, shape index: {}]
  %s9 = inlined_call_operand.vmem [shape: f32[2,1,32], index: 9, kind: input, shape index: {}]
  %s10 = inlined_call_operand.vmem [shape: f32[2,1,32], index: 10, kind: input, shape index: {}]
  %s11 = inlined_call_operand.vmem [shape: bf16[2,32,128], index: 11, kind: input, shape index: {}]
  %s12 = inlined_call_operand.vmem [shape: f32[2,1,128], index: 12, kind: input, shape index: {}]
  %s13 = inlined_call_operand.vmem [shape: bf16[2,128,32], index: 13, kind: input, shape index: {}]
  %s14 = inlined_call_operand.vmem [shape: f32[2,1,32], index: 14, kind: input, shape index: {}]
  %s15 = inlined_call_operand.vmem [shape: f32[1,32], index: 15, kind: input, shape index: {}]
  %s16 = inlined_call_operand.vmem [shape: f32[1,32], index: 16, kind: input, shape index: {}]
  %s17 = inlined_call_operand.hbm [shape: f32[16,32], index: 17, kind: output, shape index: {}]
  %s18 = sld [smem:[#allocation0]]
  $region78: #{tpu_custom_call.1} parent=0
    _
  %s20 = ssub.s32 1, %s18
  %s21 = scalar_select 0, %s20, %s18
  $region1: #{tpu_custom_call.1} parent=0
    #allocation2 [shape = 'u8[8192]{0}', space=vmem, size = 0x2000, scoped, tag = 'output window, operand 0, single buffered']
    #allocation3 [shape = 's32[1]{0}', space=sflag, size = 0x4, scoped, tag = 'scoped memory for tpu_custom_call.1']
    %22 = vsyncpa [#allocation3], 0
    // Predicated region
    $region2: #{tpu_custom_call.1} parent=1 // pred_check
      _
    $region3: #{tpu_custom_call.1} parent=1 // pred_check_branch
      %24 = sbr.rel (0) target = $region5
    $region4: #{tpu_custom_call.1} parent=1 // pred_region
      _
    $region5: #{tpu_custom_call.1} parent=1 // pred_fallthru
      _
    // Predicated region
    $region6: #{tpu_custom_call.1} parent=1 // pred_check
      _
    $region7: #{tpu_custom_call.1} parent=1 // pred_check_branch
      %26 = sbr.rel (0) target = $region9
    $region8: #{tpu_custom_call.1} parent=1 // pred_region
      _
    $region9: #{tpu_custom_call.1} parent=1 // pred_fallthru
      _
    // Predicated region
    $region10: #{tpu_custom_call.1} parent=1 // pred_check
      _
    $region11: #{tpu_custom_call.1} parent=1 // pred_check_branch
      %28 = sbr.rel (0) target = $region13
    $region12: #{tpu_custom_call.1} parent=1 // pred_region
      _
    $region13: #{tpu_custom_call.1} parent=1 // pred_fallthru
      _
    // Predicated region
    $region14: #{tpu_custom_call.1} parent=1 // pred_check
      _
    $region15: #{tpu_custom_call.1} parent=1 // pred_check_branch
      %30 = sbr.rel (0) target = $region17
    $region16: #{tpu_custom_call.1} parent=1 // pred_region
      _
    $region17: #{tpu_custom_call.1} parent=1 // pred_fallthru
      _
    // Predicated region
    $region18: #{tpu_custom_call.1} parent=1 // pred_check
      _
    $region19: #{tpu_custom_call.1} parent=1 // pred_check_branch
      %32 = sbr.rel (0) target = $region21
    $region20: #{tpu_custom_call.1} parent=1 // pred_region
      _
    $region21: #{tpu_custom_call.1} parent=1 // pred_fallthru
      _
    // Predicated region
    $region22: #{tpu_custom_call.1} parent=1 // pred_check
      _
    $region23: #{tpu_custom_call.1} parent=1 // pred_check_branch
      %34 = sbr.rel (0) target = $region25
    $region24: #{tpu_custom_call.1} parent=1 // pred_region
      _
    $region25: #{tpu_custom_call.1} parent=1 // pred_fallthru
      _
    // Predicated region
    $region26: #{tpu_custom_call.1} parent=1 // pred_check
      _
    $region27: #{tpu_custom_call.1} parent=1 // pred_check_branch
      %36 = sbr.rel (0) target = $region29
    $region28: #{tpu_custom_call.1} parent=1 // pred_region
      _
    $region29: #{tpu_custom_call.1} parent=1 // pred_fallthru
      _
    // Predicated region
    $region30: #{tpu_custom_call.1} parent=1 // pred_check
      _
    $region31: #{tpu_custom_call.1} parent=1 // pred_check_branch
      %38 = sbr.rel (0) target = $region33
    $region32: #{tpu_custom_call.1} parent=1 // pred_region
      _
    $region33: #{tpu_custom_call.1} parent=1 // pred_fallthru
      _
    // Predicated region
    $region34: #{tpu_custom_call.1} parent=1 // pred_check
      _
    $region35: #{tpu_custom_call.1} parent=1 // pred_check_branch
      %40 = sbr.rel (0) target = $region37
    $region36: #{tpu_custom_call.1} parent=1 // pred_region
      _
    $region37: #{tpu_custom_call.1} parent=1 // pred_fallthru
      _
    // Predicated region
    $region38: #{tpu_custom_call.1} parent=1 // pred_check
      _
    $region39: #{tpu_custom_call.1} parent=1 // pred_check_branch
      %42 = sbr.rel (0) target = $region41
    $region40: #{tpu_custom_call.1} parent=1 // pred_region
      _
    $region41: #{tpu_custom_call.1} parent=1 // pred_fallthru
      _
    // Predicated region
    $region42: #{tpu_custom_call.1} parent=1 // pred_check
      _
    $region43: #{tpu_custom_call.1} parent=1 // pred_check_branch
      %44 = sbr.rel (0) target = $region45
    $region44: #{tpu_custom_call.1} parent=1 // pred_region
      _
    $region45: #{tpu_custom_call.1} parent=1 // pred_fallthru
      _
    // Predicated region
    $region46: #{tpu_custom_call.1} parent=1 // pred_check
      _
    $region47: #{tpu_custom_call.1} parent=1 // pred_check_branch
      %46 = sbr.rel (0) target = $region49
    $region48: #{tpu_custom_call.1} parent=1 // pred_region
      _
    $region49: #{tpu_custom_call.1} parent=1 // pred_fallthru
      _
    // Predicated region
    $region50: #{tpu_custom_call.1} parent=1 // pred_check
      _
    $region51: #{tpu_custom_call.1} parent=1 // pred_check_branch
      %48 = sbr.rel (0) target = $region53
    $region52: #{tpu_custom_call.1} parent=1 // pred_region
      _
    $region53: #{tpu_custom_call.1} parent=1 // pred_fallthru
      _
    // Predicated region
    $region54: #{tpu_custom_call.1} parent=1 // pred_check
      _
    $region55: #{tpu_custom_call.1} parent=1 // pred_check_branch
      %50 = sbr.rel (0) target = $region57
    $region56: #{tpu_custom_call.1} parent=1 // pred_region
      _
    $region57: #{tpu_custom_call.1} parent=1 // pred_fallthru
      _
    // Predicated region
    $region58: #{tpu_custom_call.1} parent=1 // pred_check
      _
    $region59: #{tpu_custom_call.1} parent=1 // pred_check_branch
      %52 = sbr.rel (0) target = $region61
    $region60: #{tpu_custom_call.1} parent=1 // pred_region
      _
    $region61: #{tpu_custom_call.1} parent=1 // pred_fallthru
      _
    // Predicated region
    $region62: #{tpu_custom_call.1} parent=1 // pred_check
      _
    $region63: #{tpu_custom_call.1} parent=1 // pred_check_branch
      %54 = sbr.rel (0) target = $region65
    $region64: #{tpu_custom_call.1} parent=1 // pred_region
      _
    $region65: #{tpu_custom_call.1} parent=1 // pred_fallthru
      _
    // Predicated region
    $region66: #{tpu_custom_call.1} parent=1 // pred_check
      _
    $region67: #{tpu_custom_call.1} parent=1 // pred_check_branch
      %56 = sbr.rel (0) target = $region69
    $region68: #{tpu_custom_call.1} parent=1 // pred_region
      _
    $region69: #{tpu_custom_call.1} parent=1 // pred_fallthru
      _
    %v58 = vld [vmem:[%s0] sm:$0xff]
    %v59 = vld [vmem:[%s0 + $0x8] sm:$0xff]
    %v60 = vld [vmem:[%s1] sm:$0xff]
    %v61 = vld [vmem:[%s1 + $0x8] sm:$0xff]
    %v62 = vld [vmem:[%s2] sm:$0xff]
    %v63 = vld [vmem:[%s2 + $0x8] sm:$0xff]
    %v64 = vld [vmem:[%s2 + $0x10] sm:$0xff]
    %v65 = vld [vmem:[%s2 + $0x18] sm:$0xff]
    %v66 = vld [vmem:[%s2 + $0x20] sm:$0xff]
    %v67 = vld [vmem:[%s2 + $0x28] sm:$0xff]
    %v68 = vld [vmem:[%s2 + $0x30] sm:$0xff]
    %v69 = vld [vmem:[%s2 + $0x38] sm:$0xff]
    %v70 = vld [vmem:[%s7] sm:$0x1]
    %v71 = vld [vmem:[%s8] sm:$0x1]
    %vm72 = vcmask 261120
    %v73 = vsel %vm72, %v58, 0.0
    %74 = vadd.xlane.f32.xlu0 %v73
    %v75 = vpop.xlane.xlu0 %74
    %v76 = vsel %vm72, %v59, 0.0
    %77 = vadd.xlane.f32.xlu0 %v76
    %v78 = vpop.xlane.xlu0 %77
    %v79 = vrcp.pop 32.0
    %v80 = vmul.f32 %v75, %v79
    %v81 = vmul.f32 %v78, %v79
    %v82 = vsub.f32 %v58, %v80
    %v83 = vsub.f32 %v59, %v81
    %v84 = vmul.f32 %v82, %v82
    %v85 = vmul.f32 %v83, %v83
    %v86 = vsel %vm72, %v84, 0.0
    %87 = vadd.xlane.f32.xlu0 %v86
    %v88 = vpop.xlane.xlu0 %87
    %v89 = vsel %vm72, %v85, 0.0
    %90 = vadd.xlane.f32.xlu0 %v89
    %v91 = vpop.xlane.xlu0 %90
    %v92 = vmul.f32 %v88, %v79
    %v93 = vmul.f32 %v91, %v79
    %v94 = vadd.f32 %v92, 1e-05
    %v95 = vadd.f32 %v93, 1e-05
    %v96 = vrsqrt.pop %v94
    %v97 = vrsqrt.pop %v95
    %v98 = vmul.f32 %v82, %v96
    %v99 = vmul.f32 %v83, %v97
    %v101 = vlaneseq
    %v102 = vshrl.u32 %v101, 7
    %v103 = vsub.s32 0, %v102
    %v104 = vrot.slane %v70, %v103
    %v106 = vmul.f32 %v98, %v104
    %v107 = vmul.f32 %v99, %v104
    %v109 = vlaneseq
    %v110 = vshrl.u32 %v109, 7
    %v111 = vsub.s32 0, %v110
    %v112 = vrot.slane %v71, %v111
    %v114 = vadd.f32 %v106, %v112
    %v115 = vadd.f32 %v107, %v112
    %v116 = vpack.c.bf16 %v115, %v114
    %v117 = vld [vmem:[%s3] sm:$0xf]
    %v118 = vld [vmem:[%s3 + $0x4] sm:$0xf]
    %v119 = vld [vmem:[%s3 + $0x8] sm:$0xf]
    %v120 = vld [vmem:[%s3 + $0xc] sm:$0xf]
    %v121 = vld [vmem:[%s4] sm:$0x1]
    %v123 = vlaneseq
    %v124 = vshrl.u32 %v123, 7
    %v125 = vsub.s32 0, %v124
    %v126 = vrot.slane %v121, %v125
    %v132 = vunpack.c.l.b16 %v117
    %v133 = vunpack.c.l.b16 %v118
    %v134 = vunpack.c.l.b16 %v119
    %v135 = vunpack.c.l.b16 %v120
    %v136 = vpack.c.b16 %v133, %v132
    %v137 = vpack.c.b16 %v135, %v134
    %v141 = vsel %vm72, %v116, 0
    %143 = vmatprep.subr.bf16.mxu0 0
    %144 = vmatpush1.bf16.msra.mxu0 0
    %145 = vmatprep.subr.bf16.mxu0 0
    %146 = vmatpush1.bf16.msra.mxu0 0
    %147 = vmatprep.subr.bf16.mxu0 0
    %148 = vmatpush1.bf16.msra.mxu0 0
    %149 = vmatprep.subr.bf16.mxu0 0
    %150 = vmatpush1.bf16.msra.mxu0 0
    %151 = vmatprep.subr.bf16.mxu0 0
    %152 = vmatpush1.bf16.msra.mxu0 0
    %153 = vmatprep.subr.bf16.mxu0 0
    %154 = vmatpush1.bf16.msra.mxu0 0
    %155 = vmatprep.subr.bf16.mxu0 0
    %156 = vmatpush1.bf16.msra.mxu0 %v137
    %157 = vmatprep.subr.bf16.mxu0 0
    %158 = vmatpush1.bf16.msra.mxu0 %v136
    %159 = vmatprep.subr.bf16.mxu0 0
    %160 = vmatpush2.bf16.msra.mxu0 0
    %161 = vmatprep.subr.bf16.mxu0 0
    %162 = vmatpush2.bf16.msra.mxu0 0
    %163 = vmatprep.subr.bf16.mxu0 0
    %164 = vmatpush2.bf16.msra.mxu0 0
    %165 = vmatprep.subr.bf16.mxu0 0
    %166 = vmatpush2.bf16.msra.mxu0 0
    %167 = vmatprep.subr.bf16.mxu0 0
    %168 = vmatpush2.bf16.msra.mxu0 0
    %169 = vmatprep.subr.bf16.mxu0 0
    %170 = vmatpush2.bf16.msra.mxu0 0
    %171 = vmatprep.subr.bf16.mxu0 0
    %172 = vmatpush2.bf16.msra.mxu0 0
    %173 = vmatprep.subr.bf16.mxu0 0
    %174 = vmatpush2.bf16.msra.mxu0 0
    %175 = vmatprep.mubr.bf16.mxu0 0
    %176 = vmatmul.mubr.bf16.gmra.mxu0 %v141
    %v177 = vpop.f32.mrf.mxu0
    %v178 = vadd.f32 %v126, %v177
    %v179 = vpop.f32.mrf.mxu0
    %v180 = vpop.f32.mrf.mxu0
    %v181 = vadd.f32 %v126, %v180
    %v182 = vpop.f32.mrf.mxu0
    %183 = vdwg.mxu0
    %v184 = vpack.c.bf16 %v181, %v178
    %193 = vrot.lane.b32.xlu0 %v62, 32
    %v194 = vpop.permute.xlu0 %193
    %195 = vrot.lane.b32.xlu0 %v63, 32
    %v196 = vpop.permute.xlu0 %195
    %197 = vrot.lane.b32.xlu0 %v64, 32
    %v198 = vpop.permute.xlu0 %197
    %199 = vrot.lane.b32.xlu0 %v65, 32
    %v200 = vpop.permute.xlu0 %199
    %201 = vrot.lane.b32.xlu0 %v66, 32
    %v202 = vpop.permute.xlu0 %201
    %203 = vrot.lane.b32.xlu0 %v67, 32
    %v204 = vpop.permute.xlu0 %203
    %205 = vrot.lane.b32.xlu0 %v68, 32
    %v206 = vpop.permute.xlu0 %205
    %207 = vrot.lane.b32.xlu0 %v69, 32
    %v208 = vpop.permute.xlu0 %207
    %v217 = vmul.f32 %v178, %v194
    %v218 = vmul.f32 %v181, %v196
    %v219 = vmul.f32 %v178, %v198
    %v220 = vmul.f32 %v181, %v200
    %v221 = vmul.f32 %v178, %v202
    %v222 = vmul.f32 %v181, %v204
    %v223 = vmul.f32 %v178, %v206
    %v224 = vmul.f32 %v181, %v208
    %v225 = vpack.c.bf16 %v218, %v217
    %v226 = vpack.c.bf16 %v220, %v219
    %v227 = vpack.c.bf16 %v222, %v221
    %v228 = vpack.c.bf16 %v224, %v223
    %229 = vrot.lane.b32.xlu0 %v62, 64
    %v230 = vpop.permute.xlu0 %229
    %231 = vrot.lane.b32.xlu0 %v63, 64
    %v232 = vpop.permute.xlu0 %231
    %233 = vrot.lane.b32.xlu0 %v64, 64
    %v234 = vpop.permute.xlu0 %233
    %235 = vrot.lane.b32.xlu0 %v65, 64
    %v236 = vpop.permute.xlu0 %235
    %237 = vrot.lane.b32.xlu0 %v66, 64
    %v238 = vpop.permute.xlu0 %237
    %239 = vrot.lane.b32.xlu0 %v67, 64
    %v240 = vpop.permute.xlu0 %239
    %241 = vrot.lane.b32.xlu0 %v68, 64
    %v242 = vpop.permute.xlu0 %241
    %243 = vrot.lane.b32.xlu0 %v69, 64
    %v244 = vpop.permute.xlu0 %243
    %v253 = vmul.f32 %v178, %v230
    %v254 = vmul.f32 %v181, %v232
    %v255 = vmul.f32 %v178, %v234
    %v256 = vmul.f32 %v181, %v236
    %v257 = vmul.f32 %v178, %v238
    %v258 = vmul.f32 %v181, %v240
    %v259 = vmul.f32 %v178, %v242
    %v260 = vmul.f32 %v181, %v244
    %v261 = vpack.c.bf16 %v254, %v253
    %v262 = vpack.c.bf16 %v256, %v255
    %v263 = vpack.c.bf16 %v258, %v257
    %v264 = vpack.c.bf16 %v260, %v259
    %269 = vrot.lane.b32.xlu0 %v225, 96
    %v270 = vpop.permute.xlu0 %269
    %271 = vrot.lane.b32.xlu0 %v226, 96
    %v272 = vpop.permute.xlu0 %271
    %273 = vrot.lane.b32.xlu0 %v227, 96
    %v274 = vpop.permute.xlu0 %273
    %275 = vrot.lane.b32.xlu0 %v228, 96
    %v276 = vpop.permute.xlu0 %275
    %v278 = vsel %vm72, %v184, 0
    %v281 = vsel %vm72, %v270, 0
    %v284 = vsel %vm72, %v272, 0
    %v287 = vsel %vm72, %v274, 0
    %v290 = vsel %vm72, %v276, 0
    %292 = vmatprep.subr.bf16.mxu0 0
    %293 = vmatpush1.bf16.xpose.msra.mxu0 0
    %294 = vmatprep.subr.bf16.mxu0 0
    %295 = vmatpush1.bf16.xpose.msra.mxu0 0
    %296 = vmatprep.subr.bf16.mxu0 0
    %297 = vmatpush1.bf16.xpose.msra.mxu0 0
    %298 = vmatprep.subr.bf16.mxu0 0
    %299 = vmatpush1.bf16.xpose.msra.mxu0 0
    %300 = vmatprep.subr.bf16.mxu0 0
    %301 = vmatpush1.bf16.xpose.msra.mxu0 %v290
    %302 = vmatprep.subr.bf16.mxu0 0
    %303 = vmatpush1.bf16.xpose.msra.mxu0 %v287
    %304 = vmatprep.subr.bf16.mxu0 0
    %305 = vmatpush1.bf16.xpose.msra.mxu0 %v284
    %306 = vmatprep.subr.bf16.mxu0 0
    %307 = vmatpush1.bf16.xpose.msra.mxu0 %v281
    %308 = vmatprep.subr.bf16.mxu0 0
    %309 = vmatpush2.bf16.xpose.msra.mxu0 0
    %310 = vmatprep.subr.bf16.mxu0 0
    %311 = vmatpush2.bf16.xpose.msra.mxu0 0
    %312 = vmatprep.subr.bf16.mxu0 0
    %313 = vmatpush2.bf16.xpose.msra.mxu0 0
    %314 = vmatprep.subr.bf16.mxu0 0
    %315 = vmatpush2.bf16.xpose.msra.mxu0 0
    %316 = vmatprep.subr.bf16.mxu0 0
    %317 = vmatpush2.bf16.xpose.msra.mxu0 0
    %318 = vmatprep.subr.bf16.mxu0 0
    %319 = vmatpush2.bf16.xpose.msra.mxu0 0
    %320 = vmatprep.subr.bf16.mxu0 0
    %321 = vmatpush2.bf16.xpose.msra.mxu0 0
    %322 = vmatprep.subr.bf16.mxu0 0
    %323 = vmatpush2.bf16.xpose.msra.mxu0 0
    %324 = vmatprep.mubr.bf16.mxu0 0
    %325 = vmatmul.mubr.bf16.gmra.mxu0 %v278
    %v326 = vpop.f32.mrf.mxu0
    %v327 = vadd.f32 0.0, %v326
    %v328 = vpop.f32.mrf.mxu0
    %v329 = vpop.f32.mrf.mxu0
    %v330 = vadd.f32 0.0, %v329
    %v331 = vpop.f32.mrf.mxu0
    %332 = vdwg.mxu0
    %v333 = vadd.f32 %v327, %v60
    %v334 = vadd.f32 %v330, %v61
    %vm335 = vcmask 130048
    %v336 = vsel %vm335, %v333, -inf
    %337 = vmax.xlane.f32.xlu0 %v336
    %v338 = vpop.xlane.xlu0 %337
    %v339 = vsel %vm335, %v334, -inf
    %340 = vmax.xlane.f32.xlu0 %v339
    %v341 = vpop.xlane.xlu0 %340
    %v342 = vsub.f32 %v333, %v338
    %v343 = vsub.f32 %v334, %v341
    %v344 = vmul.f32 %v342, 1.442695
    %v345 = vpow.pop %v344
    %v346 = vmul.f32 %v343, 1.442695
    %v347 = vpow.pop %v346
    %v348 = vsel %vm335, %v345, 0.0
    %349 = vadd.xlane.f32.xlu0 %v348
    %v350 = vpop.xlane.xlu0 %349
    %v351 = vsel %vm335, %v347, 0.0
    %352 = vadd.xlane.f32.xlu0 %v351
    %v353 = vpop.xlane.xlu0 %352
    %v354 = vrcp.pop %v350
    %v355 = vrcp.pop %v353
    %v356 = vmul.f32 %v345, %v354
    %v357 = vmul.f32 %v347, %v355
    %360 = vrot.lane.b32.xlu0 %v60, 16
    %v361 = vpop.permute.xlu0 %360
    %362 = vrot.lane.b32.xlu0 %v61, 16
    %v363 = vpop.permute.xlu0 %362
    %v366 = vadd.f32 %v327, %v361
    %v367 = vadd.f32 %v330, %v363
    %vm368 = vcmask 261248
    %v369 = vsel %vm368, %v366, -inf
    %370 = vmax.xlane.f32.xlu0 %v369
    %v371 = vpop.xlane.xlu0 %370
    %v372 = vsel %vm368, %v367, -inf
    %373 = vmax.xlane.f32.xlu0 %v372
    %v374 = vpop.xlane.xlu0 %373
    %v375 = vsub.f32 %v366, %v371
    %v376 = vsub.f32 %v367, %v374
    %v377 = vmul.f32 %v375, 1.442695
    %v378 = vpow.pop %v377
    %v379 = vmul.f32 %v376, 1.442695
    %v380 = vpow.pop %v379
    %383 = vrot.lane.b32.xlu0 %v378, 112
    %v384 = vpop.permute.xlu0 %383
    %385 = vrot.lane.b32.xlu0 %v380, 112
    %v386 = vpop.permute.xlu0 %385
    %v389 = vsel %vm335, %v384, 0.0
    %390 = vadd.xlane.f32.xlu0 %v389
    %v391 = vpop.xlane.xlu0 %390
    %v392 = vsel %vm335, %v386, 0.0
    %393 = vadd.xlane.f32.xlu0 %v392
    %v394 = vpop.xlane.xlu0 %393
    %v395 = vrcp.pop %v391
    %v396 = vrcp.pop %v394
    %v397 = vmul.f32 %v378, %v395
    %v398 = vmul.f32 %v380, %v396
    %399 = vrot.lane.b32.xlu0 %v60, 32
    %v400 = vpop.permute.xlu0 %399
    %401 = vrot.lane.b32.xlu0 %v61, 32
    %v402 = vpop.permute.xlu0 %401
    %v405 = vadd.f32 %v327, %v400
    %v406 = vadd.f32 %v330, %v402
    %vm407 = vcmask 392448
    %v408 = vsel %vm407, %v405, -inf
    %409 = vmax.xlane.f32.xlu0 %v408
    %v410 = vpop.xlane.xlu0 %409
    %v411 = vsel %vm407, %v406, -inf
    %412 = vmax.xlane.f32.xlu0 %v411
    %v413 = vpop.xlane.xlu0 %412
    %v414 = vsub.f32 %v405, %v410
    %v415 = vsub.f32 %v406, %v413
    %v416 = vmul.f32 %v414, 1.442695
    %v417 = vpow.pop %v416
    %v418 = vmul.f32 %v415, 1.442695
    %v419 = vpow.pop %v418
    %422 = vrot.lane.b32.xlu0 %v417, 96
    %v423 = vpop.permute.xlu0 %422
    %424 = vrot.lane.b32.xlu0 %v419, 96
    %v425 = vpop.permute.xlu0 %424
    %v428 = vsel %vm335, %v423, 0.0
    %429 = vadd.xlane.f32.xlu0 %v428
    %v430 = vpop.xlane.xlu0 %429
    %v431 = vsel %vm335, %v425, 0.0
    %432 = vadd.xlane.f32.xlu0 %v431
    %v433 = vpop.xlane.xlu0 %432
    %v434 = vrcp.pop %v430
    %v435 = vrcp.pop %v433
    %v436 = vmul.f32 %v417, %v434
    %v437 = vmul.f32 %v419, %v435
    %438 = vrot.lane.b32.xlu0 %v60, 48
    %v439 = vpop.permute.xlu0 %438
    %440 = vrot.lane.b32.xlu0 %v61, 48
    %v441 = vpop.permute.xlu0 %440
    %v444 = vadd.f32 %v327, %v439
    %v445 = vadd.f32 %v330, %v441
    %vm446 = vcmask 523648
    %v447 = vsel %vm446, %v444, -inf
    %448 = vmax.xlane.f32.xlu0 %v447
    %v449 = vpop.xlane.xlu0 %448
    %v450 = vsel %vm446, %v445, -inf
    %451 = vmax.xlane.f32.xlu0 %v450
    %v452 = vpop.xlane.xlu0 %451
    %v453 = vsub.f32 %v444, %v449
    %v454 = vsub.f32 %v445, %v452
    %v455 = vmul.f32 %v453, 1.442695
    %v456 = vpow.pop %v455
    %v457 = vmul.f32 %v454, 1.442695
    %v458 = vpow.pop %v457
    %461 = vrot.lane.b32.xlu0 %v456, 80
    %v462 = vpop.permute.xlu0 %461
    %463 = vrot.lane.b32.xlu0 %v458, 80
    %v464 = vpop.permute.xlu0 %463
    %v467 = vsel %vm335, %v462, 0.0
    %468 = vadd.xlane.f32.xlu0 %v467
    %v469 = vpop.xlane.xlu0 %468
    %v470 = vsel %vm335, %v464, 0.0
    %471 = vadd.xlane.f32.xlu0 %v470
    %v472 = vpop.xlane.xlu0 %471
    %v473 = vrcp.pop %v469
    %v474 = vrcp.pop %v472
    %v475 = vmul.f32 %v456, %v473
    %v476 = vmul.f32 %v458, %v474
    %v477 = vsel %vm335, %v356, %v397
    %v478 = vsel %vm335, %v357, %v398
    %v479 = vsel %vm72, %v477, %v436
    %v480 = vsel %vm72, %v478, %v437
    %vm481 = vcmask 392192
    %v482 = vsel %vm481, %v479, %v475
    %v483 = vsel %vm481, %v480, %v476
    %v484 = vpack.c.bf16 %v483, %v482
    %489 = vrot.lane.b32.xlu0 %v261, 64
    %v490 = vpop.permute.xlu0 %489
    %491 = vrot.lane.b32.xlu0 %v262, 64
    %v492 = vpop.permute.xlu0 %491
    %493 = vrot.lane.b32.xlu0 %v263, 64
    %v494 = vpop.permute.xlu0 %493
    %495 = vrot.lane.b32.xlu0 %v264, 64
    %v496 = vpop.permute.xlu0 %495
    %vm501 = vcmask 523264
    %v503 = vsel %vm501, %v484, 0
    %505 = vmatprep.subr.bf16.mxu0 0
    %506 = vmatpush1.bf16.msra.mxu0 0
    %507 = vmatprep.subr.bf16.mxu0 0
    %508 = vmatpush1.bf16.msra.mxu0 0
    %509 = vmatprep.subr.bf16.mxu0 0
    %510 = vmatpush1.bf16.msra.mxu0 0
    %511 = vmatprep.subr.bf16.mxu0 0
    %512 = vmatpush1.bf16.msra.mxu0 0
    %513 = vmatprep.subr.bf16.mxu0 0
    %514 = vmatpush1.bf16.msra.mxu0 %v496
    %515 = vmatprep.subr.bf16.mxu0 0
    %516 = vmatpush1.bf16.msra.mxu0 %v494
    %517 = vmatprep.subr.bf16.mxu0 0
    %518 = vmatpush1.bf16.msra.mxu0 %v492
    %519 = vmatprep.subr.bf16.mxu0 0
    %520 = vmatpush1.bf16.msra.mxu0 %v490
    %521 = vmatprep.subr.bf16.mxu0 0
    %522 = vmatpush2.bf16.msra.mxu0 0
    %523 = vmatprep.subr.bf16.mxu0 0
    %524 = vmatpush2.bf16.msra.mxu0 0
    %525 = vmatprep.subr.bf16.mxu0 0
    %526 = vmatpush2.bf16.msra.mxu0 0
    %527 = vmatprep.subr.bf16.mxu0 0
    %528 = vmatpush2.bf16.msra.mxu0 0
    %529 = vmatprep.subr.bf16.mxu0 0
    %530 = vmatpush2.bf16.msra.mxu0 0
    %531 = vmatprep.subr.bf16.mxu0 0
    %532 = vmatpush2.bf16.msra.mxu0 0
    %533 = vmatprep.subr.bf16.mxu0 0
    %534 = vmatpush2.bf16.msra.mxu0 0
    %535 = vmatprep.subr.bf16.mxu0 0
    %536 = vmatpush2.bf16.msra.mxu0 0
    %537 = vmatprep.mubr.bf16.mxu0 0
    %538 = vmatmul.mubr.bf16.gmra.mxu0 %v503
    %v539 = vpop.f32.mrf.mxu0
    %v540 = vadd.f32 0.0, %v539
    %v541 = vpop.f32.mrf.mxu0
    %v542 = vpop.f32.mrf.mxu0
    %v543 = vadd.f32 0.0, %v542
    %v544 = vpop.f32.mrf.mxu0
    %545 = vdwg.mxu0
    %v546 = vpack.c.bf16 %v543, %v540
    %v547 = vld [vmem:[%s5] sm:$0xf]
    %v548 = vld [vmem:[%s5 + $0x4] sm:$0xf]
    %v549 = vld [vmem:[%s5 + $0x8] sm:$0xf]
    %v550 = vld [vmem:[%s5 + $0xc] sm:$0xf]
    %v555 = vunpack.c.l.b16 %v547
    %v556 = vunpack.c.l.b16 %v548
    %v557 = vunpack.c.l.b16 %v549
    %v558 = vunpack.c.l.b16 %v550
    %v559 = vpack.c.b16 %v556, %v555
    %v560 = vpack.c.b16 %v558, %v557
    %v564 = vsel %vm72, %v546, 0
    %566 = vmatprep.subr.bf16.mxu0 0
    %567 = vmatpush1.bf16.msra.mxu0 0
    %568 = vmatprep.subr.bf16.mxu0 0
    %569 = vmatpush1.bf16.msra.mxu0 0
    %570 = vmatprep.subr.bf16.mxu0 0
    %571 = vmatpush1.bf16.msra.mxu0 0
    %572 = vmatprep.subr.bf16.mxu0 0
    %573 = vmatpush1.bf16.msra.mxu0 0
    %574 = vmatprep.subr.bf16.mxu0 0
    %575 = vmatpush1.bf16.msra.mxu0 0
    %576 = vmatprep.subr.bf16.mxu0 0
    %577 = vmatpush1.bf16.msra.mxu0 0
    %578 = vmatprep.subr.bf16.mxu0 0
    %579 = vmatpush1.bf16.msra.mxu0 %v560
    %580 = vmatprep.subr.bf16.mxu0 0
    %581 = vmatpush1.bf16.msra.mxu0 %v559
    %582 = vmatprep.subr.bf16.mxu0 0
    %583 = vmatpush2.bf16.msra.mxu0 0
    %584 = vmatprep.subr.bf16.mxu0 0
    %585 = vmatpush2.bf16.msra.mxu0 0
    %586 = vmatprep.subr.bf16.mxu0 0
    %587 = vmatpush2.bf16.msra.mxu0 0
    %588 = vmatprep.subr.bf16.mxu0 0
    %589 = vmatpush2.bf16.msra.mxu0 0
    %590 = vmatprep.subr.bf16.mxu0 0
    %591 = vmatpush2.bf16.msra.mxu0 0
    %592 = vmatprep.subr.bf16.mxu0 0
    %593 = vmatpush2.bf16.msra.mxu0 0
    %594 = vmatprep.subr.bf16.mxu0 0
    %595 = vmatpush2.bf16.msra.mxu0 0
    %596 = vmatprep.subr.bf16.mxu0 0
    %597 = vmatpush2.bf16.msra.mxu0 0
    %598 = vmatprep.mubr.bf16.mxu0 0
    %599 = vmatmul.mubr.bf16.gmra.mxu0 %v564
    %v600 = vpop.f32.mrf.mxu0
    %v601 = vadd.f32 0.0, %v600
    %v602 = vpop.f32.mrf.mxu0
    %v603 = vpop.f32.mrf.mxu0
    %v604 = vadd.f32 0.0, %v603
    %v605 = vpop.f32.mrf.mxu0
    %606 = vdwg.mxu0
    %v607 = vadd.f32 %v58, %v601
    %v608 = vadd.f32 %v59, %v604
    %v609 = vld [vmem:[%s6] sm:$0x1]
    %v611 = vlaneseq
    %v612 = vshrl.u32 %v611, 7
    %v613 = vsub.s32 0, %v612
    %v614 = vrot.slane %v609, %v613
    %v616 = vadd.f32 %v607, %v614
    %v617 = vadd.f32 %v608, %v614
    %v618 = vld [vmem:[%s9] sm:$0x1]
    %v619 = vld [vmem:[%s10] sm:$0x1]
    %v620 = vsel %vm72, %v616, 0.0
    %621 = vadd.xlane.f32.xlu0 %v620
    %v622 = vpop.xlane.xlu0 %621
    %v623 = vsel %vm72, %v617, 0.0
    %624 = vadd.xlane.f32.xlu0 %v623
    %v625 = vpop.xlane.xlu0 %624
    %v626 = vmul.f32 %v622, %v79
    %v627 = vmul.f32 %v625, %v79
    %v628 = vsub.f32 %v616, %v626
    %v629 = vsub.f32 %v617, %v627
    %v630 = vmul.f32 %v628, %v628
    %v631 = vmul.f32 %v629, %v629
    %v632 = vsel %vm72, %v630, 0.0
    %633 = vadd.xlane.f32.xlu0 %v632
    %v634 = vpop.xlane.xlu0 %633
    %v635 = vsel %vm72, %v631, 0.0
    %636 = vadd.xlane.f32.xlu0 %v635
    %v637 = vpop.xlane.xlu0 %636
    %v638 = vmul.f32 %v634, %v79
    %v639 = vmul.f32 %v637, %v79
    %v640 = vadd.f32 %v638, 1e-05
    %v641 = vadd.f32 %v639, 1e-05
    %v642 = vrsqrt.pop %v640
    %v643 = vrsqrt.pop %v641
    %v644 = vmul.f32 %v628, %v642
    %v645 = vmul.f32 %v629, %v643
    %v647 = vlaneseq
    %v648 = vshrl.u32 %v647, 7
    %v649 = vsub.s32 0, %v648
    %v650 = vrot.slane %v618, %v649
    %v652 = vmul.f32 %v644, %v650
    %v653 = vmul.f32 %v645, %v650
    %v655 = vlaneseq
    %v656 = vshrl.u32 %v655, 7
    %v657 = vsub.s32 0, %v656
    %v658 = vrot.slane %v619, %v657
    %v660 = vadd.f32 %v652, %v658
    %v661 = vadd.f32 %v653, %v658
    %v662 = vpack.c.bf16 %v661, %v660
    %v663 = vld [vmem:[%s11] sm:$0xf]
    %v664 = vld [vmem:[%s11 + $0x4] sm:$0xf]
    %v665 = vld [vmem:[%s11 + $0x8] sm:$0xf]
    %v666 = vld [vmem:[%s11 + $0xc] sm:$0xf]
    %v667 = vld [vmem:[%s12] sm:$0x1]
    %v669 = vlaneseq
    %v670 = vshrl.u32 %v669, 7
    %v671 = vsub.s32 0, %v670
    %v672 = vrot.slane %v667, %v671
    %v678 = vunpack.c.l.b16 %v663
    %v679 = vunpack.c.l.b16 %v664
    %v680 = vunpack.c.l.b16 %v665
    %v681 = vunpack.c.l.b16 %v666
    %v682 = vpack.c.b16 %v679, %v678
    %v683 = vpack.c.b16 %v681, %v680
    %v687 = vsel %vm72, %v662, 0
    %689 = vmatprep.subr.bf16.mxu0 0
    %690 = vmatpush1.bf16.msra.mxu0 0
    %691 = vmatprep.subr.bf16.mxu0 0
    %692 = vmatpush1.bf16.msra.mxu0 0
    %693 = vmatprep.subr.bf16.mxu0 0
    %694 = vmatpush1.bf16.msra.mxu0 0
    %695 = vmatprep.subr.bf16.mxu0 0
    %696 = vmatpush1.bf16.msra.mxu0 0
    %697 = vmatprep.subr.bf16.mxu0 0
    %698 = vmatpush1.bf16.msra.mxu0 0
    %699 = vmatprep.subr.bf16.mxu0 0
    %700 = vmatpush1.bf16.msra.mxu0 0
    %701 = vmatprep.subr.bf16.mxu0 0
    %702 = vmatpush1.bf16.msra.mxu0 %v683
    %703 = vmatprep.subr.bf16.mxu0 0
    %704 = vmatpush1.bf16.msra.mxu0 %v682
    %705 = vmatprep.subr.bf16.mxu0 0
    %706 = vmatpush2.bf16.msra.mxu0 0
    %707 = vmatprep.subr.bf16.mxu0 0
    %708 = vmatpush2.bf16.msra.mxu0 0
    %709 = vmatprep.subr.bf16.mxu0 0
    %710 = vmatpush2.bf16.msra.mxu0 0
    %711 = vmatprep.subr.bf16.mxu0 0
    %712 = vmatpush2.bf16.msra.mxu0 0
    %713 = vmatprep.subr.bf16.mxu0 0
    %714 = vmatpush2.bf16.msra.mxu0 0
    %715 = vmatprep.subr.bf16.mxu0 0
    %716 = vmatpush2.bf16.msra.mxu0 0
    %717 = vmatprep.subr.bf16.mxu0 0
    %718 = vmatpush2.bf16.msra.mxu0 0
    %719 = vmatprep.subr.bf16.mxu0 0
    %720 = vmatpush2.bf16.msra.mxu0 0
    %721 = vmatprep.mubr.bf16.mxu0 0
    %722 = vmatmul.mubr.bf16.gmra.mxu0 %v687
    %v723 = vpop.f32.mrf.mxu0
    %v724 = vadd.f32 %v672, %v723
    %v725 = vpop.f32.mrf.mxu0
    %v726 = vpop.f32.mrf.mxu0
    %v727 = vadd.f32 %v672, %v726
    %v728 = vpop.f32.mrf.mxu0
    %729 = vdwg.mxu0
    %v730 = vmul.f32 %v724, 0.70710677
    %v731 = vmul.f32 %v727, 0.70710677
    %v732 = vand.u32 2147483647, %v730
    %v733 = vand.u32 2147483647, %v731
    %v734 = vmul.f32 %v732, 0.3275911
    %v735 = vmul.f32 %v733, 0.3275911
    %v736 = vadd.f32 %v734, 1.0
    %v737 = vadd.f32 %v735, 1.0
    %v738 = vrcp.pop %v736
    %v739 = vmul.f32 1.0, %v738
    %v740 = vrcp.pop %v737
    %v741 = vmul.f32 1.0, %v740
    %v742 = vmul.f32 %v739, 1.0614054
    %v743 = vmul.f32 %v741, 1.0614054
    %v744 = vadd.f32 %v742, -1.4531521
    %v745 = vadd.f32 %v743, -1.4531521
    %v746 = vmul.f32 %v739, %v744
    %v747 = vmul.f32 %v741, %v745
    %v748 = vadd.f32 %v746, 1.4214138
    %v749 = vadd.f32 %v747, 1.4214138
    %v750 = vmul.f32 %v739, %v748
    %v751 = vmul.f32 %v741, %v749
    %v752 = vadd.f32 %v750, -0.28449672
    %v753 = vadd.f32 %v751, -0.28449672
    %v754 = vmul.f32 %v739, %v752
    %v755 = vmul.f32 %v741, %v753
    %v756 = vadd.f32 %v754, 0.2548296
    %v757 = vadd.f32 %v755, 0.2548296
    %v758 = vmul.f32 %v739, %v756
    %v759 = vmul.f32 %v741, %v757
    %v760 = vsub.f32 0.0, %v732
    %v761 = vsub.f32 0.0, %v733
    %v762 = vmul.f32 %v760, %v732
    %v763 = vmul.f32 %v761, %v733
    %v764 = vmul.f32 %v762, 1.442695
    %v765 = vpow.pop %v764
    %v766 = vmul.f32 %v763, 1.442695
    %v767 = vpow.pop %v766
    %v768 = vmul.f32 %v758, %v765
    %v769 = vmul.f32 %v759, %v767
    %v770 = vsub.f32 1.0, %v768
    %v771 = vsub.f32 1.0, %v769
    %vm772 = vcmp.lt.f32.partialorder %v730, 0.0
    %vm773 = vcmp.lt.f32.partialorder %v731, 0.0
    %v774 = vsub.f32 0.0, %v770
    %v775 = vsub.f32 0.0, %v771
    %v776 = vsel %vm772, %v774, %v770
    %v777 = vsel %vm773, %v775, %v771
    %v778 = vmul.f32 %v724, 0.5
    %v779 = vmul.f32 %v727, 0.5
    %v780 = vadd.f32 %v776, 1.0
    %v781 = vadd.f32 %v777, 1.0
    %v782 = vmul.f32 %v778, %v780
    %v783 = vmul.f32 %v779, %v781
    %v784 = vpack.c.bf16 %v783, %v782
    %v785 = vld [vmem:[%s13] sm:$0xf]
    %v786 = vld [vmem:[%s13 + $0x4] sm:$0xf]
    %v787 = vld [vmem:[%s13 + $0x8] sm:$0xf]
    %v788 = vld [vmem:[%s13 + $0xc] sm:$0xf]
    %v789 = vld [vmem:[%s13 + $0x10] sm:$0xf]
    %v790 = vld [vmem:[%s13 + $0x14] sm:$0xf]
    %v791 = vld [vmem:[%s13 + $0x18] sm:$0xf]
    %v792 = vld [vmem:[%s13 + $0x1c] sm:$0xf]
    %v793 = vld [vmem:[%s13 + $0x20] sm:$0xf]
    %v794 = vld [vmem:[%s13 + $0x24] sm:$0xf]
    %v795 = vld [vmem:[%s13 + $0x28] sm:$0xf]
    %v796 = vld [vmem:[%s13 + $0x2c] sm:$0xf]
    %v797 = vld [vmem:[%s13 + $0x30] sm:$0xf]
    %v798 = vld [vmem:[%s13 + $0x34] sm:$0xf]
    %v799 = vld [vmem:[%s13 + $0x38] sm:$0xf]
    %v800 = vld [vmem:[%s13 + $0x3c] sm:$0xf]
    %v801 = vld [vmem:[%s14] sm:$0x1]
    %v803 = vlaneseq
    %v804 = vshrl.u32 %v803, 7
    %v805 = vsub.s32 0, %v804
    %v806 = vrot.slane %v801, %v805
    %v824 = vunpack.c.l.b16 %v785
    %v825 = vunpack.c.l.b16 %v786
    %v826 = vunpack.c.l.b16 %v787
    %v827 = vunpack.c.l.b16 %v788
    %v828 = vunpack.c.l.b16 %v789
    %v829 = vunpack.c.l.b16 %v790
    %v830 = vunpack.c.l.b16 %v791
    %v831 = vunpack.c.l.b16 %v792
    %v832 = vunpack.c.l.b16 %v793
    %v833 = vunpack.c.l.b16 %v794
    %v834 = vunpack.c.l.b16 %v795
    %v835 = vunpack.c.l.b16 %v796
    %v836 = vunpack.c.l.b16 %v797
    %v837 = vunpack.c.l.b16 %v798
    %v838 = vunpack.c.l.b16 %v799
    %v839 = vunpack.c.l.b16 %v800
    %v840 = vpack.c.b16 %v825, %v824
    %v841 = vpack.c.b16 %v827, %v826
    %v842 = vpack.c.b16 %v829, %v828
    %v843 = vpack.c.b16 %v831, %v830
    %v844 = vpack.c.b16 %v833, %v832
    %v845 = vpack.c.b16 %v835, %v834
    %v846 = vpack.c.b16 %v837, %v836
    %v847 = vpack.c.b16 %v839, %v838
    %856 = vmatprep.subr.bf16.mxu0 0
    %857 = vmatpush1.bf16.msra.mxu0 %v847
    %858 = vmatprep.subr.bf16.mxu0 0
    %859 = vmatpush1.bf16.msra.mxu0 %v846
    %860 = vmatprep.subr.bf16.mxu0 0
    %861 = vmatpush1.bf16.msra.mxu0 %v845
    %862 = vmatprep.subr.bf16.mxu0 0
    %863 = vmatpush1.bf16.msra.mxu0 %v844
    %864 = vmatprep.subr.bf16.mxu0 0
    %865 = vmatpush1.bf16.msra.mxu0 %v843
    %866 = vmatprep.subr.bf16.mxu0 0
    %867 = vmatpush1.bf16.msra.mxu0 %v842
    %868 = vmatprep.subr.bf16.mxu0 0
    %869 = vmatpush1.bf16.msra.mxu0 %v841
    %870 = vmatprep.subr.bf16.mxu0 0
    %871 = vmatpush1.bf16.msra.mxu0 %v840
    %872 = vmatprep.subr.bf16.mxu0 0
    %873 = vmatpush2.bf16.msra.mxu0 0
    %874 = vmatprep.subr.bf16.mxu0 0
    %875 = vmatpush2.bf16.msra.mxu0 0
    %876 = vmatprep.subr.bf16.mxu0 0
    %877 = vmatpush2.bf16.msra.mxu0 0
    %878 = vmatprep.subr.bf16.mxu0 0
    %879 = vmatpush2.bf16.msra.mxu0 0
    %880 = vmatprep.subr.bf16.mxu0 0
    %881 = vmatpush2.bf16.msra.mxu0 0
    %882 = vmatprep.subr.bf16.mxu0 0
    %883 = vmatpush2.bf16.msra.mxu0 0
    %884 = vmatprep.subr.bf16.mxu0 0
    %885 = vmatpush2.bf16.msra.mxu0 0
    %886 = vmatprep.subr.bf16.mxu0 0
    %887 = vmatpush2.bf16.msra.mxu0 0
    %888 = vmatprep.mubr.bf16.mxu0 0
    %889 = vmatmul.mubr.bf16.gmra.mxu0 %v784
    %v890 = vpop.f32.mrf.mxu0
    %v891 = vadd.f32 %v806, %v890
    %v892 = vpop.f32.mrf.mxu0
    %v893 = vpop.f32.mrf.mxu0
    %v894 = vadd.f32 %v806, %v893
    %v895 = vpop.f32.mrf.mxu0
    %896 = vdwg.mxu0
    %v897 = vadd.f32 %v616, %v891
    %v898 = vadd.f32 %v617, %v894
    %s899 = scalar_lea.vmem %s7, 1
    %v900 = vld [vmem:[%s899] sm:$0x1]
    %s901 = scalar_lea.vmem %s8, 1
    %v902 = vld [vmem:[%s901] sm:$0x1]
    %v903 = vsel %vm72, %v897, 0.0
    %904 = vadd.xlane.f32.xlu0 %v903
    %v905 = vpop.xlane.xlu0 %904
    %v906 = vsel %vm72, %v898, 0.0
    %907 = vadd.xlane.f32.xlu0 %v906
    %v908 = vpop.xlane.xlu0 %907
    %v909 = vmul.f32 %v905, %v79
    %v910 = vmul.f32 %v908, %v79
    %v911 = vsub.f32 %v897, %v909
    %v912 = vsub.f32 %v898, %v910
    %v913 = vmul.f32 %v911, %v911
    %v914 = vmul.f32 %v912, %v912
    %v915 = vsel %vm72, %v913, 0.0
    %916 = vadd.xlane.f32.xlu0 %v915
    %v917 = vpop.xlane.xlu0 %916
    %v918 = vsel %vm72, %v914, 0.0
    %919 = vadd.xlane.f32.xlu0 %v918
    %v920 = vpop.xlane.xlu0 %919
    %v921 = vmul.f32 %v917, %v79
    %v922 = vmul.f32 %v920, %v79
    %v923 = vadd.f32 %v921, 1e-05
    %v924 = vadd.f32 %v922, 1e-05
    %v925 = vrsqrt.pop %v923
    %v926 = vrsqrt.pop %v924
    %v927 = vmul.f32 %v911, %v925
    %v928 = vmul.f32 %v912, %v926
    %v930 = vlaneseq
    %v931 = vshrl.u32 %v930, 7
    %v932 = vsub.s32 0, %v931
    %v933 = vrot.slane %v900, %v932
    %v935 = vmul.f32 %v927, %v933
    %v936 = vmul.f32 %v928, %v933
    %v938 = vlaneseq
    %v939 = vshrl.u32 %v938, 7
    %v940 = vsub.s32 0, %v939
    %v941 = vrot.slane %v902, %v940
    %v943 = vadd.f32 %v935, %v941
    %v944 = vadd.f32 %v936, %v941
    %v945 = vpack.c.bf16 %v944, %v943
    %s946 = scalar_lea.vmem %s3, 16
    %v947 = vld [vmem:[%s946] sm:$0xf]
    %v948 = vld [vmem:[%s946 + $0x4] sm:$0xf]
    %v949 = vld [vmem:[%s946 + $0x8] sm:$0xf]
    %v950 = vld [vmem:[%s946 + $0xc] sm:$0xf]
    %s951 = scalar_lea.vmem %s4, 1
    %v952 = vld [vmem:[%s951] sm:$0x1]
    %v954 = vlaneseq
    %v955 = vshrl.u32 %v954, 7
    %v956 = vsub.s32 0, %v955
    %v957 = vrot.slane %v952, %v956
    %v963 = vunpack.c.l.b16 %v947
    %v964 = vunpack.c.l.b16 %v948
    %v965 = vunpack.c.l.b16 %v949
    %v966 = vunpack.c.l.b16 %v950
    %v967 = vpack.c.b16 %v964, %v963
    %v968 = vpack.c.b16 %v966, %v965
    %v972 = vsel %vm72, %v945, 0
    %974 = vmatprep.subr.bf16.mxu0 0
    %975 = vmatpush1.bf16.msra.mxu0 0
    %976 = vmatprep.subr.bf16.mxu0 0
    %977 = vmatpush1.bf16.msra.mxu0 0
    %978 = vmatprep.subr.bf16.mxu0 0
    %979 = vmatpush1.bf16.msra.mxu0 0
    %980 = vmatprep.subr.bf16.mxu0 0
    %981 = vmatpush1.bf16.msra.mxu0 0
    %982 = vmatprep.subr.bf16.mxu0 0
    %983 = vmatpush1.bf16.msra.mxu0 0
    %984 = vmatprep.subr.bf16.mxu0 0
    %985 = vmatpush1.bf16.msra.mxu0 0
    %986 = vmatprep.subr.bf16.mxu0 0
    %987 = vmatpush1.bf16.msra.mxu0 %v968
    %988 = vmatprep.subr.bf16.mxu0 0
    %989 = vmatpush1.bf16.msra.mxu0 %v967
    %990 = vmatprep.subr.bf16.mxu0 0
    %991 = vmatpush2.bf16.msra.mxu0 0
    %992 = vmatprep.subr.bf16.mxu0 0
    %993 = vmatpush2.bf16.msra.mxu0 0
    %994 = vmatprep.subr.bf16.mxu0 0
    %995 = vmatpush2.bf16.msra.mxu0 0
    %996 = vmatprep.subr.bf16.mxu0 0
    %997 = vmatpush2.bf16.msra.mxu0 0
    %998 = vmatprep.subr.bf16.mxu0 0
    %999 = vmatpush2.bf16.msra.mxu0 0
    %1000 = vmatprep.subr.bf16.mxu0 0
    %1001 = vmatpush2.bf16.msra.mxu0 0
    %1002 = vmatprep.subr.bf16.mxu0 0
    %1003 = vmatpush2.bf16.msra.mxu0 0
    %1004 = vmatprep.subr.bf16.mxu0 0
    %1005 = vmatpush2.bf16.msra.mxu0 0
    %1006 = vmatprep.mubr.bf16.mxu0 0
    %1007 = vmatmul.mubr.bf16.gmra.mxu0 %v972
    %v1008 = vpop.f32.mrf.mxu0
    %v1009 = vadd.f32 %v957, %v1008
    %v1010 = vpop.f32.mrf.mxu0
    %v1011 = vpop.f32.mrf.mxu0
    %v1012 = vadd.f32 %v957, %v1011
    %v1013 = vpop.f32.mrf.mxu0
    %1014 = vdwg.mxu0
    %v1015 = vpack.c.bf16 %v1012, %v1009
    %v1016 = vmul.f32 %v1009, %v194
    %v1017 = vmul.f32 %v1012, %v196
    %v1018 = vmul.f32 %v1009, %v198
    %v1019 = vmul.f32 %v1012, %v200
    %v1020 = vmul.f32 %v1009, %v202
    %v1021 = vmul.f32 %v1012, %v204
    %v1022 = vmul.f32 %v1009, %v206
    %v1023 = vmul.f32 %v1012, %v208
    %v1024 = vpack.c.bf16 %v1017, %v1016
    %v1025 = vpack.c.bf16 %v1019, %v1018
    %v1026 = vpack.c.bf16 %v1021, %v1020
    %v1027 = vpack.c.bf16 %v1023, %v1022
    %v1028 = vmul.f32 %v1009, %v230
    %v1029 = vmul.f32 %v1012, %v232
    %v1030 = vmul.f32 %v1009, %v234
    %v1031 = vmul.f32 %v1012, %v236
    %v1032 = vmul.f32 %v1009, %v238
    %v1033 = vmul.f32 %v1012, %v240
    %v1034 = vmul.f32 %v1009, %v242
    %v1035 = vmul.f32 %v1012, %v244
    %v1036 = vpack.c.bf16 %v1029, %v1028
    %v1037 = vpack.c.bf16 %v1031, %v1030
    %v1038 = vpack.c.bf16 %v1033, %v1032
    %v1039 = vpack.c.bf16 %v1035, %v1034
    %1044 = vrot.lane.b32.xlu0 %v1024, 96
    %v1045 = vpop.permute.xlu0 %1044
    %1046 = vrot.lane.b32.xlu0 %v1025, 96
    %v1047 = vpop.permute.xlu0 %1046
    %1048 = vrot.lane.b32.xlu0 %v1026, 96
    %v1049 = vpop.permute.xlu0 %1048
    %1050 = vrot.lane.b32.xlu0 %v1027, 96
    %v1051 = vpop.permute.xlu0 %1050
    %v1053 = vsel %vm72, %v1015, 0
    %v1056 = vsel %vm72, %v1045, 0
    %v1059 = vsel %vm72, %v1047, 0
    %v1062 = vsel %vm72, %v1049, 0
    %v1065 = vsel %vm72, %v1051, 0
    %1067 = vmatprep.subr.bf16.mxu0 0
    %1068 = vmatpush1.bf16.xpose.msra.mxu0 0
    %1069 = vmatprep.subr.bf16.mxu0 0
    %1070 = vmatpush1.bf16.xpose.msra.mxu0 0
    %1071 = vmatprep.subr.bf16.mxu0 0
    %1072 = vmatpush1.bf16.xpose.msra.mxu0 0
    %1073 = vmatprep.subr.bf16.mxu0 0
    %1074 = vmatpush1.bf16.xpose.msra.mxu0 0
    %1075 = vmatprep.subr.bf16.mxu0 0
    %1076 = vmatpush1.bf16.xpose.msra.mxu0 %v1065
    %1077 = vmatprep.subr.bf16.mxu0 0
    %1078 = vmatpush1.bf16.xpose.msra.mxu0 %v1062
    %1079 = vmatprep.subr.bf16.mxu0 0
    %1080 = vmatpush1.bf16.xpose.msra.mxu0 %v1059
    %1081 = vmatprep.subr.bf16.mxu0 0
    %1082 = vmatpush1.bf16.xpose.msra.mxu0 %v1056
    %1083 = vmatprep.subr.bf16.mxu0 0
    %1084 = vmatpush2.bf16.xpose.msra.mxu0 0
    %1085 = vmatprep.subr.bf16.mxu0 0
    %1086 = vmatpush2.bf16.xpose.msra.mxu0 0
    %1087 = vmatprep.subr.bf16.mxu0 0
    %1088 = vmatpush2.bf16.xpose.msra.mxu0 0
    %1089 = vmatprep.subr.bf16.mxu0 0
    %1090 = vmatpush2.bf16.xpose.msra.mxu0 0
    %1091 = vmatprep.subr.bf16.mxu0 0
    %1092 = vmatpush2.bf16.xpose.msra.mxu0 0
    %1093 = vmatprep.subr.bf16.mxu0 0
    %1094 = vmatpush2.bf16.xpose.msra.mxu0 0
    %1095 = vmatprep.subr.bf16.mxu0 0
    %1096 = vmatpush2.bf16.xpose.msra.mxu0 0
    %1097 = vmatprep.subr.bf16.mxu0 0
    %1098 = vmatpush2.bf16.xpose.msra.mxu0 0
    %1099 = vmatprep.mubr.bf16.mxu0 0
    %1100 = vmatmul.mubr.bf16.gmra.mxu0 %v1053
    %v1101 = vpop.f32.mrf.mxu0
    %v1102 = vadd.f32 0.0, %v1101
    %v1103 = vpop.f32.mrf.mxu0
    %v1104 = vpop.f32.mrf.mxu0
    %v1105 = vadd.f32 0.0, %v1104
    %v1106 = vpop.f32.mrf.mxu0
    %1107 = vdwg.mxu0
    %v1108 = vadd.f32 %v1102, %v60
    %v1109 = vadd.f32 %v1105, %v61
    %v1110 = vsel %vm335, %v1108, -inf
    %1111 = vmax.xlane.f32.xlu0 %v1110
    %v1112 = vpop.xlane.xlu0 %1111
    %v1113 = vsel %vm335, %v1109, -inf
    %1114 = vmax.xlane.f32.xlu0 %v1113
    %v1115 = vpop.xlane.xlu0 %1114
    %v1116 = vsub.f32 %v1108, %v1112
    %v1117 = vsub.f32 %v1109, %v1115
    %v1118 = vmul.f32 %v1116, 1.442695
    %v1119 = vpow.pop %v1118
    %v1120 = vmul.f32 %v1117, 1.442695
    %v1121 = vpow.pop %v1120
    %v1122 = vsel %vm335, %v1119, 0.0
    %1123 = vadd.xlane.f32.xlu0 %v1122
    %v1124 = vpop.xlane.xlu0 %1123
    %v1125 = vsel %vm335, %v1121, 0.0
    %1126 = vadd.xlane.f32.xlu0 %v1125
    %v1127 = vpop.xlane.xlu0 %1126
    %v1128 = vrcp.pop %v1124
    %v1129 = vrcp.pop %v1127
    %v1130 = vmul.f32 %v1119, %v1128
    %v1131 = vmul.f32 %v1121, %v1129
    %v1132 = vadd.f32 %v1102, %v361
    %v1133 = vadd.f32 %v1105, %v363
    %v1134 = vsel %vm368, %v1132, -inf
    %1135 = vmax.xlane.f32.xlu0 %v1134
    %v1136 = vpop.xlane.xlu0 %1135
    %v1137 = vsel %vm368, %v1133, -inf
    %1138 = vmax.xlane.f32.xlu0 %v1137
    %v1139 = vpop.xlane.xlu0 %1138
    %v1140 = vsub.f32 %v1132, %v1136
    %v1141 = vsub.f32 %v1133, %v1139
    %v1142 = vmul.f32 %v1140, 1.442695
    %v1143 = vpow.pop %v1142
    %v1144 = vmul.f32 %v1141, 1.442695
    %v1145 = vpow.pop %v1144
    %1148 = vrot.lane.b32.xlu0 %v1143, 112
    %v1149 = vpop.permute.xlu0 %1148
    %1150 = vrot.lane.b32.xlu0 %v1145, 112
    %v1151 = vpop.permute.xlu0 %1150
    %v1154 = vsel %vm335, %v1149, 0.0
    %1155 = vadd.xlane.f32.xlu0 %v1154
    %v1156 = vpop.xlane.xlu0 %1155
    %v1157 = vsel %vm335, %v1151, 0.0
    %1158 = vadd.xlane.f32.xlu0 %v1157
    %v1159 = vpop.xlane.xlu0 %1158
    %v1160 = vrcp.pop %v1156
    %v1161 = vrcp.pop %v1159
    %v1162 = vmul.f32 %v1143, %v1160
    %v1163 = vmul.f32 %v1145, %v1161
    %v1164 = vadd.f32 %v1102, %v400
    %v1165 = vadd.f32 %v1105, %v402
    %v1166 = vsel %vm407, %v1164, -inf
    %1167 = vmax.xlane.f32.xlu0 %v1166
    %v1168 = vpop.xlane.xlu0 %1167
    %v1169 = vsel %vm407, %v1165, -inf
    %1170 = vmax.xlane.f32.xlu0 %v1169
    %v1171 = vpop.xlane.xlu0 %1170
    %v1172 = vsub.f32 %v1164, %v1168
    %v1173 = vsub.f32 %v1165, %v1171
    %v1174 = vmul.f32 %v1172, 1.442695
    %v1175 = vpow.pop %v1174
    %v1176 = vmul.f32 %v1173, 1.442695
    %v1177 = vpow.pop %v1176
    %1180 = vrot.lane.b32.xlu0 %v1175, 96
    %v1181 = vpop.permute.xlu0 %1180
    %1182 = vrot.lane.b32.xlu0 %v1177, 96
    %v1183 = vpop.permute.xlu0 %1182
    %v1186 = vsel %vm335, %v1181, 0.0
    %1187 = vadd.xlane.f32.xlu0 %v1186
    %v1188 = vpop.xlane.xlu0 %1187
    %v1189 = vsel %vm335, %v1183, 0.0
    %1190 = vadd.xlane.f32.xlu0 %v1189
    %v1191 = vpop.xlane.xlu0 %1190
    %v1192 = vrcp.pop %v1188
    %v1193 = vrcp.pop %v1191
    %v1194 = vmul.f32 %v1175, %v1192
    %v1195 = vmul.f32 %v1177, %v1193
    %v1196 = vadd.f32 %v1102, %v439
    %v1197 = vadd.f32 %v1105, %v441
    %v1198 = vsel %vm446, %v1196, -inf
    %1199 = vmax.xlane.f32.xlu0 %v1198
    %v1200 = vpop.xlane.xlu0 %1199
    %v1201 = vsel %vm446, %v1197, -inf
    %1202 = vmax.xlane.f32.xlu0 %v1201
    %v1203 = vpop.xlane.xlu0 %1202
    %v1204 = vsub.f32 %v1196, %v1200
    %v1205 = vsub.f32 %v1197, %v1203
    %v1206 = vmul.f32 %v1204, 1.442695
    %v1207 = vpow.pop %v1206
    %v1208 = vmul.f32 %v1205, 1.442695
    %v1209 = vpow.pop %v1208
    %1212 = vrot.lane.b32.xlu0 %v1207, 80
    %v1213 = vpop.permute.xlu0 %1212
    %1214 = vrot.lane.b32.xlu0 %v1209, 80
    %v1215 = vpop.permute.xlu0 %1214
    %v1218 = vsel %vm335, %v1213, 0.0
    %1219 = vadd.xlane.f32.xlu0 %v1218
    %v1220 = vpop.xlane.xlu0 %1219
    %v1221 = vsel %vm335, %v1215, 0.0
    %1222 = vadd.xlane.f32.xlu0 %v1221
    %v1223 = vpop.xlane.xlu0 %1222
    %v1224 = vrcp.pop %v1220
    %v1225 = vrcp.pop %v1223
    %v1226 = vmul.f32 %v1207, %v1224
    %v1227 = vmul.f32 %v1209, %v1225
    %v1228 = vsel %vm335, %v1130, %v1162
    %v1229 = vsel %vm335, %v1131, %v1163
    %v1230 = vsel %vm72, %v1228, %v1194
    %v1231 = vsel %vm72, %v1229, %v1195
    %v1232 = vsel %vm481, %v1230, %v1226
    %v1233 = vsel %vm481, %v1231, %v1227
    %v1234 = vpack.c.bf16 %v1233, %v1232
    %1239 = vrot.lane.b32.xlu0 %v1036, 64
    %v1240 = vpop.permute.xlu0 %1239
    %1241 = vrot.lane.b32.xlu0 %v1037, 64
    %v1242 = vpop.permute.xlu0 %1241
    %1243 = vrot.lane.b32.xlu0 %v1038, 64
    %v1244 = vpop.permute.xlu0 %1243
    %1245 = vrot.lane.b32.xlu0 %v1039, 64
    %v1246 = vpop.permute.xlu0 %1245
    %v1252 = vsel %vm501, %v1234, 0
    %1254 = vmatprep.subr.bf16.mxu0 0
    %1255 = vmatpush1.bf16.msra.mxu0 0
    %1256 = vmatprep.subr.bf16.mxu0 0
    %1257 = vmatpush1.bf16.msra.mxu0 0
    %1258 = vmatprep.subr.bf16.mxu0 0
    %1259 = vmatpush1.bf16.msra.mxu0 0
    %1260 = vmatprep.subr.bf16.mxu0 0
    %1261 = vmatpush1.bf16.msra.mxu0 0
    %1262 = vmatprep.subr.bf16.mxu0 0
    %1263 = vmatpush1.bf16.msra.mxu0 %v1246
    %1264 = vmatprep.subr.bf16.mxu0 0
    %1265 = vmatpush1.bf16.msra.mxu0 %v1244
    %1266 = vmatprep.subr.bf16.mxu0 0
    %1267 = vmatpush1.bf16.msra.mxu0 %v1242
    %1268 = vmatprep.subr.bf16.mxu0 0
    %1269 = vmatpush1.bf16.msra.mxu0 %v1240
    %1270 = vmatprep.subr.bf16.mxu0 0
    %1271 = vmatpush2.bf16.msra.mxu0 0
    %1272 = vmatprep.subr.bf16.mxu0 0
    %1273 = vmatpush2.bf16.msra.mxu0 0
    %1274 = vmatprep.subr.bf16.mxu0 0
    %1275 = vmatpush2.bf16.msra.mxu0 0
    %1276 = vmatprep.subr.bf16.mxu0 0
    %1277 = vmatpush2.bf16.msra.mxu0 0
    %1278 = vmatprep.subr.bf16.mxu0 0
    %1279 = vmatpush2.bf16.msra.mxu0 0
    %1280 = vmatprep.subr.bf16.mxu0 0
    %1281 = vmatpush2.bf16.msra.mxu0 0
    %1282 = vmatprep.subr.bf16.mxu0 0
    %1283 = vmatpush2.bf16.msra.mxu0 0
    %1284 = vmatprep.subr.bf16.mxu0 0
    %1285 = vmatpush2.bf16.msra.mxu0 0
    %1286 = vmatprep.mubr.bf16.mxu0 0
    %1287 = vmatmul.mubr.bf16.gmra.mxu0 %v1252
    %v1288 = vpop.f32.mrf.mxu0
    %v1289 = vadd.f32 0.0, %v1288
    %v1290 = vpop.f32.mrf.mxu0
    %v1291 = vpop.f32.mrf.mxu0
    %v1292 = vadd.f32 0.0, %v1291
    %v1293 = vpop.f32.mrf.mxu0
    %1294 = vdwg.mxu0
    %v1295 = vpack.c.bf16 %v1292, %v1289
    %s1296 = scalar_lea.vmem %s5, 16
    %v1297 = vld [vmem:[%s1296] sm:$0xf]
    %v1298 = vld [vmem:[%s1296 + $0x4] sm:$0xf]
    %v1299 = vld [vmem:[%s1296 + $0x8] sm:$0xf]
    %v1300 = vld [vmem:[%s1296 + $0xc] sm:$0xf]
    %v1305 = vunpack.c.l.b16 %v1297
    %v1306 = vunpack.c.l.b16 %v1298
    %v1307 = vunpack.c.l.b16 %v1299
    %v1308 = vunpack.c.l.b16 %v1300
    %v1309 = vpack.c.b16 %v1306, %v1305
    %v1310 = vpack.c.b16 %v1308, %v1307
    %v1314 = vsel %vm72, %v1295, 0
    %1316 = vmatprep.subr.bf16.mxu0 0
    %1317 = vmatpush1.bf16.msra.mxu0 0
    %1318 = vmatprep.subr.bf16.mxu0 0
    %1319 = vmatpush1.bf16.msra.mxu0 0
    %1320 = vmatprep.subr.bf16.mxu0 0
    %1321 = vmatpush1.bf16.msra.mxu0 0
    %1322 = vmatprep.subr.bf16.mxu0 0
    %1323 = vmatpush1.bf16.msra.mxu0 0
    %1324 = vmatprep.subr.bf16.mxu0 0
    %1325 = vmatpush1.bf16.msra.mxu0 0
    %1326 = vmatprep.subr.bf16.mxu0 0
    %1327 = vmatpush1.bf16.msra.mxu0 0
    %1328 = vmatprep.subr.bf16.mxu0 0
    %1329 = vmatpush1.bf16.msra.mxu0 %v1310
    %1330 = vmatprep.subr.bf16.mxu0 0
    %1331 = vmatpush1.bf16.msra.mxu0 %v1309
    %1332 = vmatprep.subr.bf16.mxu0 0
    %1333 = vmatpush2.bf16.msra.mxu0 0
    %1334 = vmatprep.subr.bf16.mxu0 0
    %1335 = vmatpush2.bf16.msra.mxu0 0
    %1336 = vmatprep.subr.bf16.mxu0 0
    %1337 = vmatpush2.bf16.msra.mxu0 0
    %1338 = vmatprep.subr.bf16.mxu0 0
    %1339 = vmatpush2.bf16.msra.mxu0 0
    %1340 = vmatprep.subr.bf16.mxu0 0
    %1341 = vmatpush2.bf16.msra.mxu0 0
    %1342 = vmatprep.subr.bf16.mxu0 0
    %1343 = vmatpush2.bf16.msra.mxu0 0
    %1344 = vmatprep.subr.bf16.mxu0 0
    %1345 = vmatpush2.bf16.msra.mxu0 0
    %1346 = vmatprep.subr.bf16.mxu0 0
    %1347 = vmatpush2.bf16.msra.mxu0 0
    %1348 = vmatprep.mubr.bf16.mxu0 0
    %1349 = vmatmul.mubr.bf16.gmra.mxu0 %v1314
    %v1350 = vpop.f32.mrf.mxu0
    %v1351 = vadd.f32 0.0, %v1350
    %v1352 = vpop.f32.mrf.mxu0
    %v1353 = vpop.f32.mrf.mxu0
    %v1354 = vadd.f32 0.0, %v1353
    %v1355 = vpop.f32.mrf.mxu0
    %1356 = vdwg.mxu0
    %v1357 = vadd.f32 %v897, %v1351
    %v1358 = vadd.f32 %v898, %v1354
    %s1359 = scalar_lea.vmem %s6, 1
    %v1360 = vld [vmem:[%s1359] sm:$0x1]
    %v1362 = vlaneseq
    %v1363 = vshrl.u32 %v1362, 7
    %v1364 = vsub.s32 0, %v1363
    %v1365 = vrot.slane %v1360, %v1364
    %v1367 = vadd.f32 %v1357, %v1365
    %v1368 = vadd.f32 %v1358, %v1365
    %s1369 = scalar_lea.vmem %s9, 1
    %v1370 = vld [vmem:[%s1369] sm:$0x1]
    %s1371 = scalar_lea.vmem %s10, 1
    %v1372 = vld [vmem:[%s1371] sm:$0x1]
    %v1373 = vsel %vm72, %v1367, 0.0
    %1374 = vadd.xlane.f32.xlu0 %v1373
    %v1375 = vpop.xlane.xlu0 %1374
    %v1376 = vsel %vm72, %v1368, 0.0
    %1377 = vadd.xlane.f32.xlu0 %v1376
    %v1378 = vpop.xlane.xlu0 %1377
    %v1379 = vmul.f32 %v1375, %v79
    %v1380 = vmul.f32 %v1378, %v79
    %v1381 = vsub.f32 %v1367, %v1379
    %v1382 = vsub.f32 %v1368, %v1380
    %v1383 = vmul.f32 %v1381, %v1381
    %v1384 = vmul.f32 %v1382, %v1382
    %v1385 = vsel %vm72, %v1383, 0.0
    %1386 = vadd.xlane.f32.xlu0 %v1385
    %v1387 = vpop.xlane.xlu0 %1386
    %v1388 = vsel %vm72, %v1384, 0.0
    %1389 = vadd.xlane.f32.xlu0 %v1388
    %v1390 = vpop.xlane.xlu0 %1389
    %v1391 = vmul.f32 %v1387, %v79
    %v1392 = vmul.f32 %v1390, %v79
    %v1393 = vadd.f32 %v1391, 1e-05
    %v1394 = vadd.f32 %v1392, 1e-05
    %v1395 = vrsqrt.pop %v1393
    %v1396 = vrsqrt.pop %v1394
    %v1397 = vmul.f32 %v1381, %v1395
    %v1398 = vmul.f32 %v1382, %v1396
    %v1400 = vlaneseq
    %v1401 = vshrl.u32 %v1400, 7
    %v1402 = vsub.s32 0, %v1401
    %v1403 = vrot.slane %v1370, %v1402
    %v1405 = vmul.f32 %v1397, %v1403
    %v1406 = vmul.f32 %v1398, %v1403
    %v1408 = vlaneseq
    %v1409 = vshrl.u32 %v1408, 7
    %v1410 = vsub.s32 0, %v1409
    %v1411 = vrot.slane %v1372, %v1410
    %v1413 = vadd.f32 %v1405, %v1411
    %v1414 = vadd.f32 %v1406, %v1411
    %v1415 = vpack.c.bf16 %v1414, %v1413
    %s1416 = scalar_lea.vmem %s11, 16
    %v1417 = vld [vmem:[%s1416] sm:$0xf]
    %v1418 = vld [vmem:[%s1416 + $0x4] sm:$0xf]
    %v1419 = vld [vmem:[%s1416 + $0x8] sm:$0xf]
    %v1420 = vld [vmem:[%s1416 + $0xc] sm:$0xf]
    %s1421 = scalar_lea.vmem %s12, 1
    %v1422 = vld [vmem:[%s1421] sm:$0x1]
    %v1424 = vlaneseq
    %v1425 = vshrl.u32 %v1424, 7
    %v1426 = vsub.s32 0, %v1425
    %v1427 = vrot.slane %v1422, %v1426
    %v1433 = vunpack.c.l.b16 %v1417
    %v1434 = vunpack.c.l.b16 %v1418
    %v1435 = vunpack.c.l.b16 %v1419
    %v1436 = vunpack.c.l.b16 %v1420
    %v1437 = vpack.c.b16 %v1434, %v1433
    %v1438 = vpack.c.b16 %v1436, %v1435
    %v1442 = vsel %vm72, %v1415, 0
    %1444 = vmatprep.subr.bf16.mxu0 0
    %1445 = vmatpush1.bf16.msra.mxu0 0
    %1446 = vmatprep.subr.bf16.mxu0 0
    %1447 = vmatpush1.bf16.msra.mxu0 0
    %1448 = vmatprep.subr.bf16.mxu0 0
    %1449 = vmatpush1.bf16.msra.mxu0 0
    %1450 = vmatprep.subr.bf16.mxu0 0
    %1451 = vmatpush1.bf16.msra.mxu0 0
    %1452 = vmatprep.subr.bf16.mxu0 0
    %1453 = vmatpush1.bf16.msra.mxu0 0
    %1454 = vmatprep.subr.bf16.mxu0 0
    %1455 = vmatpush1.bf16.msra.mxu0 0
    %1456 = vmatprep.subr.bf16.mxu0 0
    %1457 = vmatpush1.bf16.msra.mxu0 %v1438
    %1458 = vmatprep.subr.bf16.mxu0 0
    %1459 = vmatpush1.bf16.msra.mxu0 %v1437
    %1460 = vmatprep.subr.bf16.mxu0 0
    %1461 = vmatpush2.bf16.msra.mxu0 0
    %1462 = vmatprep.subr.bf16.mxu0 0
    %1463 = vmatpush2.bf16.msra.mxu0 0
    %1464 = vmatprep.subr.bf16.mxu0 0
    %1465 = vmatpush2.bf16.msra.mxu0 0
    %1466 = vmatprep.subr.bf16.mxu0 0
    %1467 = vmatpush2.bf16.msra.mxu0 0
    %1468 = vmatprep.subr.bf16.mxu0 0
    %1469 = vmatpush2.bf16.msra.mxu0 0
    %1470 = vmatprep.subr.bf16.mxu0 0
    %1471 = vmatpush2.bf16.msra.mxu0 0
    %1472 = vmatprep.subr.bf16.mxu0 0
    %1473 = vmatpush2.bf16.msra.mxu0 0
    %1474 = vmatprep.subr.bf16.mxu0 0
    %1475 = vmatpush2.bf16.msra.mxu0 0
    %1476 = vmatprep.mubr.bf16.mxu0 0
    %1477 = vmatmul.mubr.bf16.gmra.mxu0 %v1442
    %v1478 = vpop.f32.mrf.mxu0
    %v1479 = vadd.f32 %v1427, %v1478
    %v1480 = vpop.f32.mrf.mxu0
    %v1481 = vpop.f32.mrf.mxu0
    %v1482 = vadd.f32 %v1427, %v1481
    %v1483 = vpop.f32.mrf.mxu0
    %1484 = vdwg.mxu0
    %v1485 = vmul.f32 %v1479, 0.70710677
    %v1486 = vmul.f32 %v1482, 0.70710677
    %v1487 = vand.u32 2147483647, %v1485
    %v1488 = vand.u32 2147483647, %v1486
    %v1489 = vmul.f32 %v1487, 0.3275911
    %v1490 = vmul.f32 %v1488, 0.3275911
    %v1491 = vadd.f32 %v1489, 1.0
    %v1492 = vadd.f32 %v1490, 1.0
    %v1493 = vrcp.pop %v1491
    %v1494 = vmul.f32 1.0, %v1493
    %v1495 = vrcp.pop %v1492
    %v1496 = vmul.f32 1.0, %v1495
    %v1497 = vmul.f32 %v1494, 1.0614054
    %v1498 = vmul.f32 %v1496, 1.0614054
    %v1499 = vadd.f32 %v1497, -1.4531521
    %v1500 = vadd.f32 %v1498, -1.4531521
    %v1501 = vmul.f32 %v1494, %v1499
    %v1502 = vmul.f32 %v1496, %v1500
    %v1503 = vadd.f32 %v1501, 1.4214138
    %v1504 = vadd.f32 %v1502, 1.4214138
    %v1505 = vmul.f32 %v1494, %v1503
    %v1506 = vmul.f32 %v1496, %v1504
    %v1507 = vadd.f32 %v1505, -0.28449672
    %v1508 = vadd.f32 %v1506, -0.28449672
    %v1509 = vmul.f32 %v1494, %v1507
    %v1510 = vmul.f32 %v1496, %v1508
    %v1511 = vadd.f32 %v1509, 0.2548296
    %v1512 = vadd.f32 %v1510, 0.2548296
    %v1513 = vmul.f32 %v1494, %v1511
    %v1514 = vmul.f32 %v1496, %v1512
    %v1515 = vsub.f32 0.0, %v1487
    %v1516 = vsub.f32 0.0, %v1488
    %v1517 = vmul.f32 %v1515, %v1487
    %v1518 = vmul.f32 %v1516, %v1488
    %v1519 = vmul.f32 %v1517, 1.442695
    %v1520 = vpow.pop %v1519
    %v1521 = vmul.f32 %v1518, 1.442695
    %v1522 = vpow.pop %v1521
    %v1523 = vmul.f32 %v1513, %v1520
    %v1524 = vmul.f32 %v1514, %v1522
    %v1525 = vsub.f32 1.0, %v1523
    %v1526 = vsub.f32 1.0, %v1524
    %vm1527 = vcmp.lt.f32.partialorder %v1485, 0.0
    %vm1528 = vcmp.lt.f32.partialorder %v1486, 0.0
    %v1529 = vsub.f32 0.0, %v1525
    %v1530 = vsub.f32 0.0, %v1526
    %v1531 = vsel %vm1527, %v1529, %v1525
    %v1532 = vsel %vm1528, %v1530, %v1526
    %v1533 = vmul.f32 %v1479, 0.5
    %v1534 = vmul.f32 %v1482, 0.5
    %v1535 = vadd.f32 %v1531, 1.0
    %v1536 = vadd.f32 %v1532, 1.0
    %v1537 = vmul.f32 %v1533, %v1535
    %v1538 = vmul.f32 %v1534, %v1536
    %v1539 = vpack.c.bf16 %v1538, %v1537
    %s1540 = scalar_lea.vmem %s13, 64
    %v1541 = vld [vmem:[%s1540] sm:$0xf]
    %v1542 = vld [vmem:[%s1540 + $0x4] sm:$0xf]
    %v1543 = vld [vmem:[%s1540 + $0x8] sm:$0xf]
    %v1544 = vld [vmem:[%s1540 + $0xc] sm:$0xf]
    %v1545 = vld [vmem:[%s1540 + $0x10] sm:$0xf]
    %v1546 = vld [vmem:[%s1540 + $0x14] sm:$0xf]
    %v1547 = vld [vmem:[%s1540 + $0x18] sm:$0xf]
    %v1548 = vld [vmem:[%s1540 + $0x1c] sm:$0xf]
    %v1549 = vld [vmem:[%s1540 + $0x20] sm:$0xf]
    %v1550 = vld [vmem:[%s1540 + $0x24] sm:$0xf]
    %v1551 = vld [vmem:[%s1540 + $0x28] sm:$0xf]
    %v1552 = vld [vmem:[%s1540 + $0x2c] sm:$0xf]
    %v1553 = vld [vmem:[%s1540 + $0x30] sm:$0xf]
    %v1554 = vld [vmem:[%s1540 + $0x34] sm:$0xf]
    %v1555 = vld [vmem:[%s1540 + $0x38] sm:$0xf]
    %v1556 = vld [vmem:[%s1540 + $0x3c] sm:$0xf]
    %s1557 = scalar_lea.vmem %s14, 1
    %v1558 = vld [vmem:[%s1557] sm:$0x1]
    %v1560 = vlaneseq
    %v1561 = vshrl.u32 %v1560, 7
    %v1562 = vsub.s32 0, %v1561
    %v1563 = vrot.slane %v1558, %v1562
    %v1581 = vunpack.c.l.b16 %v1541
    %v1582 = vunpack.c.l.b16 %v1542
    %v1583 = vunpack.c.l.b16 %v1543
    %v1584 = vunpack.c.l.b16 %v1544
    %v1585 = vunpack.c.l.b16 %v1545
    %v1586 = vunpack.c.l.b16 %v1546
    %v1587 = vunpack.c.l.b16 %v1547
    %v1588 = vunpack.c.l.b16 %v1548
    %v1589 = vunpack.c.l.b16 %v1549
    %v1590 = vunpack.c.l.b16 %v1550
    %v1591 = vunpack.c.l.b16 %v1551
    %v1592 = vunpack.c.l.b16 %v1552
    %v1593 = vunpack.c.l.b16 %v1553
    %v1594 = vunpack.c.l.b16 %v1554
    %v1595 = vunpack.c.l.b16 %v1555
    %v1596 = vunpack.c.l.b16 %v1556
    %v1597 = vpack.c.b16 %v1582, %v1581
    %v1598 = vpack.c.b16 %v1584, %v1583
    %v1599 = vpack.c.b16 %v1586, %v1585
    %v1600 = vpack.c.b16 %v1588, %v1587
    %v1601 = vpack.c.b16 %v1590, %v1589
    %v1602 = vpack.c.b16 %v1592, %v1591
    %v1603 = vpack.c.b16 %v1594, %v1593
    %v1604 = vpack.c.b16 %v1596, %v1595
    %1613 = vmatprep.subr.bf16.mxu0 0
    %1614 = vmatpush1.bf16.msra.mxu0 %v1604
    %1615 = vmatprep.subr.bf16.mxu0 0
    %1616 = vmatpush1.bf16.msra.mxu0 %v1603
    %1617 = vmatprep.subr.bf16.mxu0 0
    %1618 = vmatpush1.bf16.msra.mxu0 %v1602
    %1619 = vmatprep.subr.bf16.mxu0 0
    %1620 = vmatpush1.bf16.msra.mxu0 %v1601
    %1621 = vmatprep.subr.bf16.mxu0 0
    %1622 = vmatpush1.bf16.msra.mxu0 %v1600
    %1623 = vmatprep.subr.bf16.mxu0 0
    %1624 = vmatpush1.bf16.msra.mxu0 %v1599
    %1625 = vmatprep.subr.bf16.mxu0 0
    %1626 = vmatpush1.bf16.msra.mxu0 %v1598
    %1627 = vmatprep.subr.bf16.mxu0 0
    %1628 = vmatpush1.bf16.msra.mxu0 %v1597
    %1629 = vmatprep.subr.bf16.mxu0 0
    %1630 = vmatpush2.bf16.msra.mxu0 0
    %1631 = vmatprep.subr.bf16.mxu0 0
    %1632 = vmatpush2.bf16.msra.mxu0 0
    %1633 = vmatprep.subr.bf16.mxu0 0
    %1634 = vmatpush2.bf16.msra.mxu0 0
    %1635 = vmatprep.subr.bf16.mxu0 0
    %1636 = vmatpush2.bf16.msra.mxu0 0
    %1637 = vmatprep.subr.bf16.mxu0 0
    %1638 = vmatpush2.bf16.msra.mxu0 0
    %1639 = vmatprep.subr.bf16.mxu0 0
    %1640 = vmatpush2.bf16.msra.mxu0 0
    %1641 = vmatprep.subr.bf16.mxu0 0
    %1642 = vmatpush2.bf16.msra.mxu0 0
    %1643 = vmatprep.subr.bf16.mxu0 0
    %1644 = vmatpush2.bf16.msra.mxu0 0
    %1645 = vmatprep.mubr.bf16.mxu0 0
    %1646 = vmatmul.mubr.bf16.gmra.mxu0 %v1539
    %v1647 = vpop.f32.mrf.mxu0
    %v1648 = vadd.f32 %v1563, %v1647
    %v1649 = vpop.f32.mrf.mxu0
    %v1650 = vpop.f32.mrf.mxu0
    %v1651 = vadd.f32 %v1563, %v1650
    %v1652 = vpop.f32.mrf.mxu0
    %1653 = vdwg.mxu0
    %v1654 = vadd.f32 %v1367, %v1648
    %v1655 = vadd.f32 %v1368, %v1651
    %v1656 = vld [vmem:[%s15] sm:$0x1]
    %v1657 = vld [vmem:[%s16] sm:$0x1]
    %v1658 = vsel %vm72, %v1654, 0.0
    %1659 = vadd.xlane.f32.xlu0 %v1658
    %v1660 = vpop.xlane.xlu0 %1659
    %v1661 = vsel %vm72, %v1655, 0.0
    %1662 = vadd.xlane.f32.xlu0 %v1661
    %v1663 = vpop.xlane.xlu0 %1662
    %v1664 = vmul.f32 %v1660, %v79
    %v1665 = vmul.f32 %v1663, %v79
    %v1666 = vsub.f32 %v1654, %v1664
    %v1667 = vsub.f32 %v1655, %v1665
    %v1668 = vmul.f32 %v1666, %v1666
    %v1669 = vmul.f32 %v1667, %v1667
    %v1670 = vsel %vm72, %v1668, 0.0
    %1671 = vadd.xlane.f32.xlu0 %v1670
    %v1672 = vpop.xlane.xlu0 %1671
    %v1673 = vsel %vm72, %v1669, 0.0
    %1674 = vadd.xlane.f32.xlu0 %v1673
    %v1675 = vpop.xlane.xlu0 %1674
    %v1676 = vmul.f32 %v1672, %v79
    %v1677 = vmul.f32 %v1675, %v79
    %v1678 = vadd.f32 %v1676, 1e-05
    %v1679 = vadd.f32 %v1677, 1e-05
    %v1680 = vrsqrt.pop %v1678
    %v1681 = vrsqrt.pop %v1679
    %v1682 = vmul.f32 %v1666, %v1680
    %v1683 = vmul.f32 %v1667, %v1681
    %v1685 = vlaneseq
    %v1686 = vshrl.u32 %v1685, 7
    %v1687 = vsub.s32 0, %v1686
    %v1688 = vrot.slane %v1656, %v1687
    %v1690 = vmul.f32 %v1682, %v1688
    %v1691 = vmul.f32 %v1683, %v1688
    %v1693 = vlaneseq
    %v1694 = vshrl.u32 %v1693, 7
    %v1695 = vsub.s32 0, %v1694
    %v1696 = vrot.slane %v1657, %v1695
    %v1698 = vadd.f32 %v1690, %v1696
    %v1699 = vadd.f32 %v1691, %v1696
    %1700 = vst.msk [vmem:[#allocation2] sm:$0xff] %vm72, %v1698
    %1701 = vst.msk [vmem:[#allocation2 + $0x8] sm:$0xff] %vm72, %v1699
    // Predicated region
    $region70: #{tpu_custom_call.1} parent=1 // pred_check
      _
    $region71: #{tpu_custom_call.1} parent=1 // pred_check_branch
      %1703 = sbr.rel (0) target = $region73
    $region72: #{tpu_custom_call.1} parent=1 // pred_region
      %s1705 = ssub.s32 256, 256
      %1706 = vsyncadd [#allocation3], %s1705
      %s1707 = sshll.u32 [#allocation2], 4
      %s1708 = int_to_ptr.vmem [resolvable:$true] %s1707
      %1713 = dma.vmem_to_hbm [thread:$0]  %s1708, 256, %s17, [#allocation3], 128, 128, 8
    $region73: #{tpu_custom_call.1} parent=1 // pred_fallthru
      _
    // Predicated region
    $region74: #{tpu_custom_call.1} parent=1 // pred_check
      _
    $region75: #{tpu_custom_call.1} parent=1 // pred_check_branch
      %1715 = sbr.rel (0) target = $region77
    $region76: #{tpu_custom_call.1} parent=1 // pred_region
      %1716 = dma.done [#allocation3], 256
    $region77: #{tpu_custom_call.1} parent=1 // pred_fallthru
      _
    %1717 = vsyncpa [#allocation3], 1

</llo_original>
